<compile_context>
chip_gen: v5e
topology: v5e:2x2
jax: 0.10.0
libtpu: 0.0.40
codegen_flags: <defaults>
</compile_context>

<pallas_src>
import functools

import jax
import jax.numpy as jnp
from jax.experimental import pallas as pl
from jax.experimental.pallas import tpu as pltpu


MATMUL_DTYPE = jnp.bfloat16      # MXU-native operand dtype; accumulation / state stay f32.
TIME_CHUNK_CAP = 32              # max time steps processed per grid step
UNROLL_CAP = 8                   # max in-chunk unroll of the recurrence
VMEM_BUDGET = 24 * 1024 * 1024   # conservative working-set budget (fits v5e/v6e/v7x)


def _round_up(x, m):
    return (x + m - 1) // m * m


# --------------------------- recurrence kernel ---------------------------

def _bilstm_chunk_kernel(x_ref, bias_ref, wih_hbm, whh_hbm,          # inputs
                         out_ref, hn_ref, cn_ref,                    # outputs
                         wih_s, whh_s, gx_s, h_s, c_s, dma_sem,      # scratch
                         *, t_chunk, bp, hp, seq_len, masked, unroll):
    """One grid step == one direction x one chunk of `t_chunk` time steps.

    x_ref   : (t_chunk*Bp, Dp)  bf16  time-major input chunk (time-reversed for dir 1)
    bias_ref: (1, 4Hp)          f32   b_ih + b_hh, gate-block padded
    wih_hbm : (2, Dp, 4Hp)      bf16  HBM, W_ih^T per direction
    whh_hbm : (2, Hp, 4Hp)      bf16  HBM, W_hh^T per direction
    out_ref : (t_chunk, Bp, Hp)       hidden states of this chunk
    hn_ref/cn_ref : (Bp, Hp)          final state (written on the last chunk)
    wih_s/whh_s   : VMEM scratch      single-buffered, weight resident per direction
    gx_s    : (t_chunk*Bp, 4Hp) f32   fused input projection for the chunk
    h_s/c_s : (Bp, Hp) f32            recurrent state carried across chunks
    """
    d_idx = pl.program_id(0)
    c_idx = pl.program_id(1)
    last_c = pl.num_programs(1) - 1

    @pl.when(c_idx == 0)
    def _():
        # Make this direction's weights resident in VMEM exactly once (single-buffered).
        cp_i = pltpu.make_async_copy(wih_hbm.at[d_idx], wih_s, dma_sem.at[0])
        cp_h = pltpu.make_async_copy(whh_hbm.at[d_idx], whh_s, dma_sem.at[1])
        cp_i.start()
        cp_h.start()
        cp_i.wait()
        cp_h.wait()
        h_s[...] = jnp.zeros_like(h_s)
        c_s[...] = jnp.zeros_like(c_s)

    # Fused input projection for the whole chunk:
    # one (t_chunk*Bp, Dp) @ (Dp, 4Hp) matmul (bf16 operands, f32 accumulation), f32 bias add.
    gx_s[...] = (jnp.dot(x_ref[...], wih_s[...], preferred_element_type=jnp.float32)
                 + bias_ref[...])

    w_hh = whh_s[...]                               # hoisted out of the step loop

    def make_loop(apply_mask):
        def step(tt, carry):
            h_prev, c_prev = carry                  # f32 (Bp, Hp)
            row = pl.multiple_of(tt * bp, bp)
            gates = gx_s[pl.ds(row, bp), :] + jnp.dot(
                h_prev.astype(w_hh.dtype), w_hh, preferred_element_type=jnp.float32)
            # PyTorch packed gate order [i, f, g, o]; each slice is 128-lane aligned.
            i_g = jax.nn.sigmoid(gates[:, 0 * hp:1 * hp])
            f_g = jax.nn.sigmoid(gates[:, 1 * hp:2 * hp])
            g_g = jnp.tanh(gates[:, 2 * hp:3 * hp])
            o_g = jax.nn.sigmoid(gates[:, 3 * hp:4 * hp])
            c_new = f_g * c_prev + i_g * g_g
            h_new = o_g * jnp.tanh(c_new)
            if apply_mask:                          # freeze state on padded tail steps
                valid = (c_idx * t_chunk + tt) < seq_len
                h_new = jnp.where(valid, h_new, h_prev)
                c_new = jnp.where(valid, c_new, c_prev)
            out_ref[tt] = h_new.astype(out_ref.dtype)
            return (h_new, c_new)

        return lambda: jax.lax.fori_loop(0, t_chunk, step, (h_s[...], c_s[...]),
                                         unroll=unroll)

    if masked:
        # Only the last chunk contains padded steps -> only it pays for the freeze selects.
        h_fin, c_fin = jax.lax.cond(c_idx == last_c, make_loop(True), make_loop(False))
    else:
        h_fin, c_fin = make_loop(False)()

    h_s[...] = h_fin
    c_s[...] = c_fin

    @pl.when(c_idx == last_c)
    def _():
        hn_ref[...] = h_fin.astype(hn_ref.dtype)
        cn_ref[...] = c_fin.astype(cn_ref.dtype)


# --------------------------- host-side preparation ---------------------------

def _pad_gate_rows(w, H, Hp):
    """(4H, K) -> (4Hp, K), zero-padding each of the 4 packed gate blocks to Hp rows."""
    K = w.shape[1]
    w4 = w.reshape(4, H, K)
    w4 = jnp.pad(w4, ((0, 0), (0, Hp - H), (0, 0)))
    return w4.reshape(4 * Hp, K)


def _pad_gate_vec(b, H, Hp):
    b4 = b.reshape(4, H)
    b4 = jnp.pad(b4, ((0, 0), (0, Hp - H)))
    return b4.reshape(4 * Hp)


def _choose_time_chunk(T, Bp, Dp, Hp, out_bytes, mm_bytes,
                       cap=TIME_CHUNK_CAP, budget=VMEM_BUDGET):
    """Pick the time-chunk length from a VMEM budget; prefer chunks that divide T."""
    G = 4 * Hp
    fixed = (Dp + Hp) * G * mm_bytes              # resident weights (single-buffered scratch)
    fixed += 2 * 1 * G * 4                        # bias block (double-buffered)
    fixed += 2 * 2 * Bp * Hp * out_bytes          # h_n / c_n blocks (double-buffered)
    fixed += 2 * Bp * Hp * 4                      # h / c state scratch
    per_t = 2 * Bp * Dp * mm_bytes                # x chunk block (double-buffered, bf16)
    per_t += 2 * Bp * Hp * out_bytes              # output chunk block (double-buffered)
    per_t += Bp * G * 4                           # fused-projection scratch (f32)
    t_max = max(1, (budget - fixed) // per_t)
    cap = max(1, int(min(cap, t_max, T)))
    # Prefer a chunk length that divides T -> no tail masking at all.
    for cand in range(cap, 0, -1):
        if T % cand == 0 and cand >= max(1, cap // 2):
            return cand, False, fixed + cand * per_t
    # Fall back to balanced chunks (minimal padded tail), masked in the last chunk only.
    n = -(-T // cap)
    t_chunk = -(-T // n)
    return t_chunk, (T % t_chunk) != 0, fixed + t_chunk * per_t


def traversal_lstm_forward(x, params, mm_dtype=MATMUL_DTYPE):
    """Forward pass of TraversalLSTM (lengths=None path, eval-mode dropout == identity).

    x: [batch, seq, input_dim]
    Returns: (outputs [batch, seq, hidden_dim], (h_n [2, batch, H], c_n [2, batch, H]))
    """
    B, T, D = x.shape
    H = params["w_hh_f"].shape[1]
    Hp = _round_up(H, 128)       # 128-lane aligned gate blocks / lane-dense output
    Bp = _round_up(B, 8)         # full sublane occupancy
    Dp = _round_up(D, 8)
    G = 4 * Hp
    out_bytes = jnp.dtype(x.dtype).itemsize
    mm_bytes = jnp.dtype(mm_dtype).itemsize

    t_chunk, masked, vmem_needed = _choose_time_chunk(T, Bp, Dp, Hp, out_bytes, mm_bytes)
    n_chunks = -(-T // t_chunk)
    Tp = n_chunks * t_chunk
    unroll = next(u for u in range(UNROLL_CAP, 0, -1) if t_chunk % u == 0)
    vmem_limit = int(min(max(vmem_needed + (8 << 20), 32 << 20), 56 << 20))

    # Time-major input for both directions (dir 1 = time-reversed), padded & chunk-flattened.
    x_tbd = jnp.transpose(x, (1, 0, 2)).astype(mm_dtype)           # (T, B, D)
    x_dirs = jnp.stack([x_tbd, x_tbd[::-1]], axis=0)               # (2, T, B, D)
    x_dirs = jnp.pad(x_dirs, ((0, 0), (0, Tp - T), (0, Bp - B), (0, Dp - D)))
    x_dirs = x_dirs.reshape(2, n_chunks, t_chunk * Bp, Dp)         # (2, C, t*Bp, Dp)

    wih_l, whh_l, bias_l = [], [], []
    for sfx in ("f", "b"):
        w_ih = params[f"w_ih_{sfx}"]
        w_hh = params[f"w_hh_{sfx}"]
        bias = params[f"b_ih_{sfx}"] + params[f"b_hh_{sfx}"]
        wih_p = _pad_gate_rows(w_ih, H, Hp)                        # (4Hp, D)
        wih_p = jnp.pad(wih_p, ((0, 0), (0, Dp - D)))              # (4Hp, Dp)
        whh_p = _pad_gate_rows(w_hh, H, Hp)                        # (4Hp, H)
        whh_p = jnp.pad(whh_p, ((0, 0), (0, Hp - H)))              # (4Hp, Hp)
        wih_l.append(wih_p.T.astype(mm_dtype))                     # (Dp, 4Hp)
        whh_l.append(whh_p.T.astype(mm_dtype))                     # (Hp, 4Hp)
        bias_l.append(_pad_gate_vec(bias, H, Hp)[None, :])         # (1, 4Hp) f32
    wih_all = jnp.stack(wih_l)                                     # (2, Dp, 4Hp)
    whh_all = jnp.stack(whh_l)                                     # (2, Hp, 4Hp)
    bias_all = jnp.stack(bias_l).astype(jnp.float32)               # (2, 1, 4Hp)

    kernel = functools.partial(_bilstm_chunk_kernel, t_chunk=t_chunk, bp=Bp, hp=Hp,
                               seq_len=T, masked=masked, unroll=unroll)

    out_all, hn_all, cn_all = pl.pallas_call(
        kernel,
        out_shape=(
            jax.ShapeDtypeStruct((2, Tp, Bp, Hp), x.dtype),
            jax.ShapeDtypeStruct((2, Bp, Hp), x.dtype),
            jax.ShapeDtypeStruct((2, Bp, Hp), x.dtype),
        ),
        grid_spec=pltpu.PrefetchScalarGridSpec(
            num_scalar_prefetch=0,
            grid=(2, n_chunks),                                    # (direction, time chunks)
            in_specs=[
                pl.BlockSpec((None, None, t_chunk * Bp, Dp), lambda d, c: (d, c, 0, 0)),  # x
                pl.BlockSpec((None, 1, G), lambda d, c: (d, 0, 0)),                       # bias
                pl.BlockSpec(memory_space=pl.ANY),                 # W_ih^T (manual DMA)
                pl.BlockSpec(memory_space=pl.ANY),                 # W_hh^T (manual DMA)
            ],
            out_specs=[
                pl.BlockSpec((None, t_chunk, Bp, Hp), lambda d, c: (d, c, 0, 0)),  # hiddens
                pl.BlockSpec((None, Bp, Hp), lambda d, c: (d, 0, 0)),              # h_n
                pl.BlockSpec((None, Bp, Hp), lambda d, c: (d, 0, 0)),              # c_n
            ],
            scratch_shapes=[
                pltpu.VMEM((Dp, G), mm_dtype),                     # resident W_ih^T
                pltpu.VMEM((Hp, G), mm_dtype),                     # resident W_hh^T
                pltpu.VMEM((t_chunk * Bp, G), jnp.float32),        # fused projection chunk
                pltpu.VMEM((Bp, Hp), jnp.float32),                 # h state
                pltpu.VMEM((Bp, Hp), jnp.float32),                 # c state
                pltpu.SemaphoreType.DMA((2,)),                     # weight-copy semaphores
            ],
        ),
        compiler_params=pltpu.CompilerParams(
            # directions are independent (shard across TensorCores); chunk axis is the
            # sequential recurrence.
            dimension_semantics=("parallel", "arbitrary"),
            vmem_limit_bytes=vmem_limit),
    )(x_dirs, bias_all, wih_all, whh_all)

    out_f = out_all[0, :T, :B, :H]                                 # (T, B, H)
    out_b = out_all[1, :T, :B, :H][::-1]                           # un-reverse backward dir
    outputs = jnp.concatenate([out_f, out_b], axis=-1)             # (T, B, 2H)
    outputs = jnp.transpose(outputs, (1, 0, 2))                    # (B, T, 2H)
    h_n = hn_all[:, :B, :H]                                        # (2, B, H)
    c_n = cn_all[:, :B, :H]                                        # (2, B, H)
    # nn.Dropout in eval mode == identity.
    return outputs, (h_n, c_n)


# --------------------------- parameter init ---------------------------

def init_traversal_lstm_params(key, input_dim, hidden_dim):
    """Deterministic params matching nn.LSTM(bidirectional=True, num_layers=1)."""
    H = hidden_dim // 2
    k = 1.0 / jnp.sqrt(jnp.float32(H))
    keys = jax.random.split(key, 8)

    def u(kk, shape):
        return jax.random.uniform(kk, shape, jnp.float32, -k, k)

    return {
        # forward direction (l0)
        "w_ih_f": u(keys[0], (4 * H, input_dim)),
        "w_hh_f": u(keys[1], (4 * H, H)),
        "b_ih_f": u(keys[2], (4 * H,)),
        "b_hh_f": u(keys[3], (4 * H,)),
        # backward direction (l0_reverse)
        "w_ih_b": u(keys[4], (4 * H, input_dim)),
        "w_hh_b": u(keys[5], (4 * H, H)),
        "b_ih_b": u(keys[6], (4 * H,)),
        "b_hh_b": u(keys[7], (4 * H,)),
    }


# ---------------- pure-JAX reference (mirrors the kernel's matmul precision) ----------------

def _ref_lstm_direction(x_tbd, w_ih, w_hh, b_ih, b_hh, mm_dtype):
    T, B, D = x_tbd.shape
    H = w_hh.shape[1]
    wih_t = jnp.transpose(w_ih).astype(mm_dtype)
    whh_t = jnp.transpose(w_hh).astype(mm_dtype)
    bias = (b_ih + b_hh)[None, :]
    gx = jnp.einsum('tbd,dg->tbg', x_tbd.astype(mm_dtype), wih_t,
                    preferred_element_type=jnp.float32) + bias

    def step(carry, g_t):
        h, c = carry
        gates = g_t + jnp.dot(h.astype(mm_dtype), whh_t,
                              preferred_element_type=jnp.float32)
        i = jax.nn.sigmoid(gates[:, 0 * H:1 * H])
        f = jax.nn.sigmoid(gates[:, 1 * H:2 * H])
        g = jnp.tanh(gates[:, 2 * H:3 * H])
        o = jax.nn.sigmoid(gates[:, 3 * H:4 * H])
        c_new = f * c + i * g
        h_new = o * jnp.tanh(c_new)
        return (h_new, c_new), h_new

    h0 = jnp.zeros((B, H), jnp.float32)
    c0 = jnp.zeros((B, H), jnp.float32)
    (hn, cn), ys = jax.lax.scan(step, (h0, c0), gx)
    return ys, hn, cn


def _ref_forward(x, params, mm_dtype=MATMUL_DTYPE):
    x_tbd = jnp.transpose(x, (1, 0, 2))
    out_f, hn_f, cn_f = _ref_lstm_direction(
        x_tbd, params["w_ih_f"], params["w_hh_f"], params["b_ih_f"], params["b_hh_f"],
        mm_dtype)
    out_b_rev, hn_b, cn_b = _ref_lstm_direction(
        x_tbd[::-1], params["w_ih_b"], params["w_hh_b"], params["b_ih_b"], params["b_hh_b"],
        mm_dtype)
    out_b = out_b_rev[::-1]
    outputs = jnp.transpose(jnp.concatenate([out_f, out_b], axis=-1), (1, 0, 2))
    return outputs, (jnp.stack([hn_f, hn_b]), jnp.stack([cn_f, cn_b]))


if __name__ == "__main__":
    batch, seq, input_dim, hidden_dim = 2, 8, 16, 32

    key = jax.random.PRNGKey(0)
    k_x, k_p = jax.random.split(key)
    x = jax.random.normal(k_x, (batch, seq, input_dim), jnp.float32)
    params = init_traversal_lstm_params(k_p, input_dim, hidden_dim)

    fwd = jax.jit(traversal_lstm_forward)
    outputs, (h_n, c_n) = fwd(x, params)
    jax.block_until_ready((outputs, h_n, c_n))

    assert outputs.shape == (batch, seq, hidden_dim)
    assert h_n.shape == (2, batch, hidden_dim // 2)
    assert c_n.shape == (2, batch, hidden_dim // 2)

    ref_out, (ref_hn, ref_cn) = _ref_forward(x, params)
    assert jnp.allclose(outputs, ref_out, atol=1e-4, rtol=1e-4), \
        float(jnp.max(jnp.abs(outputs - ref_out)))
    assert jnp.allclose(h_n, ref_hn, atol=1e-4, rtol=1e-4)
    assert jnp.allclose(c_n, ref_cn, atol=1e-4, rtol=1e-4)

    print("KERNEL_OK")
</pallas_src>

<mosaic_0001>
module attributes {stable_mosaic.version = 11 : i64} {
  func.func @_bilstm_chunk_kernel(%arg0: i32, %arg1: i32, %arg2: memref<1x1x64x16xbf16, #tpu.memory_space<vmem>>, %arg3: memref<1x1x512xf32, #tpu.memory_space<vmem>>, %arg4: memref<2x16x512xbf16, #tpu.memory_space<any>>, %arg5: memref<2x128x512xbf16, #tpu.memory_space<any>>, %arg6: memref<1x8x8x128xf32, #tpu.memory_space<vmem>>, %arg7: memref<1x8x128xf32, #tpu.memory_space<vmem>>, %arg8: memref<1x8x128xf32, #tpu.memory_space<vmem>>, %arg9: memref<16x512xbf16, #tpu.memory_space<vmem>>, %arg10: memref<128x512xbf16, #tpu.memory_space<vmem>>, %arg11: memref<64x512xf32, #tpu.memory_space<vmem>>, %arg12: memref<8x128xf32, #tpu.memory_space<vmem>>, %arg13: memref<8x128xf32, #tpu.memory_space<vmem>>, %arg14: memref<2x!tpu.dma_semaphore, #tpu.memory_space<semaphore_mem>>) attributes {dimension_semantics = [#tpu.dimension_semantics<parallel>, #tpu.dimension_semantics<arbitrary>], iteration_bounds = array<i64: 2, 1>, scalar_prefetch = 0 : i64, scratch_operands = 6 : i64, tpu.core_type = #tpu.core_type<tc>, window_params = [{transform_indices = @transform_0, window_bounds = array<i64: 1, 1, 64, 16>}, {transform_indices = @transform_1, window_bounds = array<i64: 1, 1, 512>}, {}, {}, {transform_indices = @transform_4, window_bounds = array<i64: 1, 8, 8, 128>}, {transform_indices = @transform_5, window_bounds = array<i64: 1, 8, 128>}, {transform_indices = @transform_6, window_bounds = array<i64: 1, 8, 128>}]} {
    %c0_i32 = arith.constant 0 : i32
    %0 = arith.cmpi eq, %arg1, %c0_i32 : i32
    %1 = arith.extui %0 : i1 to i32
    %c0_i32_0 = arith.constant 0 : i32
    %2 = arith.cmpi ne, %1, %c0_i32_0 : i32
    scf.if %2 {
      %c0_i32_96 = arith.constant 0 : i32
      %c0_i32_97 = arith.constant 0 : i32
      %c0_i32_98 = arith.constant 0 : i32
      %308 = tpu.memref_slice %arg4[%arg0, %c0_i32_97, %c0_i32_98] : memref<2x16x512xbf16, #tpu.memory_space<any>> -> memref<1x16x512xbf16, #tpu.memory_space<any>>
      %309 = tpu.memref_squeeze %308 : memref<1x16x512xbf16, #tpu.memory_space<any>> -> memref<16x512xbf16, #tpu.memory_space<any>>
      %310 = tpu.memref_slice %arg14[%c0_i32_96] : memref<2x!tpu.dma_semaphore, #tpu.memory_space<semaphore_mem>> -> memref<1x!tpu.dma_semaphore, #tpu.memory_space<semaphore_mem>>
      %311 = tpu.memref_squeeze %310 : memref<1x!tpu.dma_semaphore, #tpu.memory_space<semaphore_mem>> -> memref<!tpu.dma_semaphore, #tpu.memory_space<semaphore_mem>>
      tpu.enqueue_dma source(%309 : memref<16x512xbf16, #tpu.memory_space<any>>) target(%arg9 : memref<16x512xbf16, #tpu.memory_space<vmem>>) target_semaphore(%311 : memref<!tpu.dma_semaphore, #tpu.memory_space<semaphore_mem>>)
      %c1_i32_99 = arith.constant 1 : i32
      %c0_i32_100 = arith.constant 0 : i32
      %c0_i32_101 = arith.constant 0 : i32
      %312 = tpu.memref_slice %arg5[%arg0, %c0_i32_100, %c0_i32_101] : memref<2x128x512xbf16, #tpu.memory_space<any>> -> memref<1x128x512xbf16, #tpu.memory_space<any>>
      %313 = tpu.memref_squeeze %312 : memref<1x128x512xbf16, #tpu.memory_space<any>> -> memref<128x512xbf16, #tpu.memory_space<any>>
      %314 = tpu.memref_slice %arg14[%c1_i32_99] : memref<2x!tpu.dma_semaphore, #tpu.memory_space<semaphore_mem>> -> memref<1x!tpu.dma_semaphore, #tpu.memory_space<semaphore_mem>>
      %315 = tpu.memref_squeeze %314 : memref<1x!tpu.dma_semaphore, #tpu.memory_space<semaphore_mem>> -> memref<!tpu.dma_semaphore, #tpu.memory_space<semaphore_mem>>
      tpu.enqueue_dma source(%313 : memref<128x512xbf16, #tpu.memory_space<any>>) target(%arg10 : memref<128x512xbf16, #tpu.memory_space<vmem>>) target_semaphore(%315 : memref<!tpu.dma_semaphore, #tpu.memory_space<semaphore_mem>>)
      %c0_i32_102 = arith.constant 0 : i32
      %c0_i32_103 = arith.constant 0 : i32
      %c0_i32_104 = arith.constant 0 : i32
      %316 = tpu.memref_slice %arg4[%arg0, %c0_i32_103, %c0_i32_104] : memref<2x16x512xbf16, #tpu.memory_space<any>> -> memref<1x16x512xbf16, #tpu.memory_space<any>>
      %317 = tpu.memref_squeeze %316 : memref<1x16x512xbf16, #tpu.memory_space<any>> -> memref<16x512xbf16, #tpu.memory_space<any>>
      %318 = tpu.memref_slice %arg14[%c0_i32_102] : memref<2x!tpu.dma_semaphore, #tpu.memory_space<semaphore_mem>> -> memref<1x!tpu.dma_semaphore, #tpu.memory_space<semaphore_mem>>
      %319 = tpu.memref_squeeze %318 : memref<1x!tpu.dma_semaphore, #tpu.memory_space<semaphore_mem>> -> memref<!tpu.dma_semaphore, #tpu.memory_space<semaphore_mem>>
      tpu.wait_dma2 semaphore(%319 : memref<!tpu.dma_semaphore, #tpu.memory_space<semaphore_mem>>) src(%317 : memref<16x512xbf16, #tpu.memory_space<any>>) dst(%arg9 : memref<16x512xbf16, #tpu.memory_space<vmem>>)
      %c1_i32_105 = arith.constant 1 : i32
      %c0_i32_106 = arith.constant 0 : i32
      %c0_i32_107 = arith.constant 0 : i32
      %320 = tpu.memref_slice %arg5[%arg0, %c0_i32_106, %c0_i32_107] : memref<2x128x512xbf16, #tpu.memory_space<any>> -> memref<1x128x512xbf16, #tpu.memory_space<any>>
      %321 = tpu.memref_squeeze %320 : memref<1x128x512xbf16, #tpu.memory_space<any>> -> memref<128x512xbf16, #tpu.memory_space<any>>
      %322 = tpu.memref_slice %arg14[%c1_i32_105] : memref<2x!tpu.dma_semaphore, #tpu.memory_space<semaphore_mem>> -> memref<1x!tpu.dma_semaphore, #tpu.memory_space<semaphore_mem>>
      %323 = tpu.memref_squeeze %322 : memref<1x!tpu.dma_semaphore, #tpu.memory_space<semaphore_mem>> -> memref<!tpu.dma_semaphore, #tpu.memory_space<semaphore_mem>>
      tpu.wait_dma2 semaphore(%323 : memref<!tpu.dma_semaphore, #tpu.memory_space<semaphore_mem>>) src(%321 : memref<128x512xbf16, #tpu.memory_space<any>>) dst(%arg10 : memref<128x512xbf16, #tpu.memory_space<vmem>>)
      %cst_108 = arith.constant 0.000000e+00 : f32
      %324 = vector.broadcast %cst_108 : f32 to vector<8x128xf32>
      %c0_109 = arith.constant 0 : index
      %c0_110 = arith.constant 0 : index
      %325 = vector.load %arg12[%c0_109, %c0_110] : memref<8x128xf32, #tpu.memory_space<vmem>>, vector<8x128xf32>
      tpu.vector_store %arg12[%c0_109, %c0_110], %324 {strides = array<i32>} : memref<8x128xf32, #tpu.memory_space<vmem>>, vector<8x128xf32>,
      %cst_111 = arith.constant 0.000000e+00 : f32
      %326 = vector.broadcast %cst_111 : f32 to vector<8x128xf32>
      %c0_112 = arith.constant 0 : index
      %c0_113 = arith.constant 0 : index
      %327 = vector.load %arg13[%c0_112, %c0_113] : memref<8x128xf32, #tpu.memory_space<vmem>>, vector<8x128xf32>
      tpu.vector_store %arg13[%c0_112, %c0_113], %326 {strides = array<i32>} : memref<8x128xf32, #tpu.memory_space<vmem>>, vector<8x128xf32>,
    } else {
    }
    %c0 = arith.constant 0 : index
    %c0_1 = arith.constant 0 : index
    %c0_2 = arith.constant 0 : index
    %c0_3 = arith.constant 0 : index
    %3 = vector.load %arg2[%c0, %c0_1, %c0_2, %c0_3] : memref<1x1x64x16xbf16, #tpu.memory_space<vmem>>, vector<1x1x64x16xbf16>
    %4 = vector.shape_cast %3 : vector<1x1x64x16xbf16> to vector<64x16xbf16>
    %c0_4 = arith.constant 0 : index
    %c0_5 = arith.constant 0 : index
    %5 = vector.load %arg9[%c0_4, %c0_5] : memref<16x512xbf16, #tpu.memory_space<vmem>>, vector<16x512xbf16>
    %cst = arith.constant dense<0.000000e+00> : vector<64x512xf32>
    %6 = tpu.matmul %4, %5, %cst {dimension_numbers = #tpu.dot_dimension_numbers<[1], [0], [0], [1], [0, 0, 1, 1], [], []>} : vector<64x16xbf16>, vector<16x512xbf16>, vector<64x512xf32> -> vector<64x512xf32>
    %c0_6 = arith.constant 0 : index
    %c0_7 = arith.constant 0 : index
    %c0_8 = arith.constant 0 : index
    %7 = vector.load %arg3[%c0_6, %c0_7, %c0_8] : memref<1x1x512xf32, #tpu.memory_space<vmem>>, vector<1x1x512xf32>
    %8 = vector.shape_cast %7 : vector<1x1x512xf32> to vector<1x512xf32>
    %9 = vector.broadcast %8 : vector<1x512xf32> to vector<64x512xf32>
    %10 = arith.addf %6, %9 : vector<64x512xf32>
    %c0_9 = arith.constant 0 : index
    %c0_10 = arith.constant 0 : index
    %11 = vector.load %arg11[%c0_9, %c0_10] : memref<64x512xf32, #tpu.memory_space<vmem>>, vector<64x512xf32>
    tpu.vector_store %arg11[%c0_9, %c0_10], %10 {strides = array<i32>} : memref<64x512xf32, #tpu.memory_space<vmem>>, vector<64x512xf32>,
    %c0_11 = arith.constant 0 : index
    %c0_12 = arith.constant 0 : index
    %12 = vector.load %arg10[%c0_11, %c0_12] : memref<128x512xbf16, #tpu.memory_space<vmem>>, vector<128x512xbf16>
    %c0_13 = arith.constant 0 : index
    %c0_14 = arith.constant 0 : index
    %13 = vector.load %arg12[%c0_13, %c0_14] : memref<8x128xf32, #tpu.memory_space<vmem>>, vector<8x128xf32>
    %c0_15 = arith.constant 0 : index
    %c0_16 = arith.constant 0 : index
    %14 = vector.load %arg13[%c0_15, %c0_16] : memref<8x128xf32, #tpu.memory_space<vmem>>, vector<8x128xf32>
    %c0_i32_17 = arith.constant 0 : i32
    %c8_i32 = arith.constant 8 : i32
    %15 = arith.muli %c0_i32_17, %c8_i32 : i32
    %16 = tpu.assume_multiple %15, 8 : i32
    %17 = arith.index_cast %16 : i32 to index
    %c0_18 = arith.constant 0 : index
    %18 = vector.load %arg11[%17, %c0_18] : memref<64x512xf32, #tpu.memory_space<vmem>>, vector<8x512xf32>
    %19 = arith.truncf %13 : vector<8x128xf32> to vector<8x128xbf16>
    %cst_19 = arith.constant dense<0.000000e+00> : vector<8x512xf32>
    %20 = tpu.matmul %19, %12, %cst_19 {dimension_numbers = #tpu.dot_dimension_numbers<[1], [0], [0], [1], [0, 0, 1, 1], [], []>} : vector<8x128xbf16>, vector<128x512xbf16>, vector<8x512xf32> -> vector<8x512xf32>
    %21 = arith.addf %18, %20 : vector<8x512xf32>
    %22 = vector.extract_strided_slice %21 {offsets = [0, 0], sizes = [8, 128], strides = [1, 1]} : vector<8x512xf32> to vector<8x128xf32>
    %23 = arith.negf %22 : vector<8x128xf32>
    %24 = math.exp %23 : vector<8x128xf32>
    %cst_20 = arith.constant 1.000000e+00 : f32
    %25 = vector.broadcast %cst_20 : f32 to vector<8x128xf32>
    %26 = arith.addf %25, %24 : vector<8x128xf32>
    %27 = arith.divf %25, %26 : vector<8x128xf32>
    %28 = vector.extract_strided_slice %21 {offsets = [0, 128], sizes = [8, 128], strides = [1, 1]} : vector<8x512xf32> to vector<8x128xf32>
    %29 = arith.negf %28 : vector<8x128xf32>
    %30 = math.exp %29 : vector<8x128xf32>
    %cst_21 = arith.constant 1.000000e+00 : f32
    %31 = vector.broadcast %cst_21 : f32 to vector<8x128xf32>
    %32 = arith.addf %31, %30 : vector<8x128xf32>
    %33 = arith.divf %31, %32 : vector<8x128xf32>
    %34 = vector.extract_strided_slice %21 {offsets = [0, 256], sizes = [8, 128], strides = [1, 1]} : vector<8x512xf32> to vector<8x128xf32>
    %35 = math.tanh %34 : vector<8x128xf32>
    %36 = vector.extract_strided_slice %21 {offsets = [0, 384], sizes = [8, 128], strides = [1, 1]} : vector<8x512xf32> to vector<8x128xf32>
    %37 = arith.negf %36 : vector<8x128xf32>
    %38 = math.exp %37 : vector<8x128xf32>
    %cst_22 = arith.constant 1.000000e+00 : f32
    %39 = vector.broadcast %cst_22 : f32 to vector<8x128xf32>
    %40 = arith.addf %39, %38 : vector<8x128xf32>
    %41 = arith.divf %39, %40 : vector<8x128xf32>
    %42 = arith.mulf %33, %14 : vector<8x128xf32>
    %43 = arith.mulf %27, %35 : vector<8x128xf32>
    %44 = arith.addf %42, %43 : vector<8x128xf32>
    %45 = math.tanh %44 : vector<8x128xf32>
    %46 = arith.mulf %41, %45 : vector<8x128xf32>
    %c0_23 = arith.constant 0 : index
    %47 = arith.index_cast %c0_i32_17 : i32 to index
    %c0_24 = arith.constant 0 : index
    %c0_25 = arith.constant 0 : index
    %48 = vector.load %arg6[%c0_23, %47, %c0_24, %c0_25] : memref<1x8x8x128xf32, #tpu.memory_space<vmem>>, vector<1x1x8x128xf32>
    %49 = vector.shape_cast %48 : vector<1x1x8x128xf32> to vector<8x128xf32>
    %50 = vector.shape_cast %46 : vector<8x128xf32> to vector<1x1x8x128xf32>
    tpu.vector_store %arg6[%c0_23, %47, %c0_24, %c0_25], %50 {strides = array<i32>} : memref<1x8x8x128xf32, #tpu.memory_space<vmem>>, vector<1x1x8x128xf32>,
    %c1_i32 = arith.constant 1 : i32
    %c8_i32_26 = arith.constant 8 : i32
    %51 = arith.muli %c1_i32, %c8_i32_26 : i32
    %52 = tpu.assume_multiple %51, 8 : i32
    %53 = arith.index_cast %52 : i32 to index
    %c0_27 = arith.constant 0 : index
    %54 = vector.load %arg11[%53, %c0_27] : memref<64x512xf32, #tpu.memory_space<vmem>>, vector<8x512xf32>
    %55 = arith.truncf %46 : vector<8x128xf32> to vector<8x128xbf16>
    %cst_28 = arith.constant dense<0.000000e+00> : vector<8x512xf32>
    %56 = tpu.matmul %55, %12, %cst_28 {dimension_numbers = #tpu.dot_dimension_numbers<[1], [0], [0], [1], [0, 0, 1, 1], [], []>} : vector<8x128xbf16>, vector<128x512xbf16>, vector<8x512xf32> -> vector<8x512xf32>
    %57 = arith.addf %54, %56 : vector<8x512xf32>
    %58 = vector.extract_strided_slice %57 {offsets = [0, 0], sizes = [8, 128], strides = [1, 1]} : vector<8x512xf32> to vector<8x128xf32>
    %59 = arith.negf %58 : vector<8x128xf32>
    %60 = math.exp %59 : vector<8x128xf32>
    %cst_29 = arith.constant 1.000000e+00 : f32
    %61 = vector.broadcast %cst_29 : f32 to vector<8x128xf32>
    %62 = arith.addf %61, %60 : vector<8x128xf32>
    %63 = arith.divf %61, %62 : vector<8x128xf32>
    %64 = vector.extract_strided_slice %57 {offsets = [0, 128], sizes = [8, 128], strides = [1, 1]} : vector<8x512xf32> to vector<8x128xf32>
    %65 = arith.negf %64 : vector<8x128xf32>
    %66 = math.exp %65 : vector<8x128xf32>
    %cst_30 = arith.constant 1.000000e+00 : f32
    %67 = vector.broadcast %cst_30 : f32 to vector<8x128xf32>
    %68 = arith.addf %67, %66 : vector<8x128xf32>
    %69 = arith.divf %67, %68 : vector<8x128xf32>
    %70 = vector.extract_strided_slice %57 {offsets = [0, 256], sizes = [8, 128], strides = [1, 1]} : vector<8x512xf32> to vector<8x128xf32>
    %71 = math.tanh %70 : vector<8x128xf32>
    %72 = vector.extract_strided_slice %57 {offsets = [0, 384], sizes = [8, 128], strides = [1, 1]} : vector<8x512xf32> to vector<8x128xf32>
    %73 = arith.negf %72 : vector<8x128xf32>
    %74 = math.exp %73 : vector<8x128xf32>
    %cst_31 = arith.constant 1.000000e+00 : f32
    %75 = vector.broadcast %cst_31 : f32 to vector<8x128xf32>
    %76 = arith.addf %75, %74 : vector<8x128xf32>
    %77 = arith.divf %75, %76 : vector<8x128xf32>
    %78 = arith.mulf %69, %44 : vector<8x128xf32>
    %79 = arith.mulf %63, %71 : vector<8x128xf32>
    %80 = arith.addf %78, %79 : vector<8x128xf32>
    %81 = math.tanh %80 : vector<8x128xf32>
    %82 = arith.mulf %77, %81 : vector<8x128xf32>
    %c0_32 = arith.constant 0 : index
    %83 = arith.index_cast %c1_i32 : i32 to index
    %c0_33 = arith.constant 0 : index
    %c0_34 = arith.constant 0 : index
    %84 = vector.load %arg6[%c0_32, %83, %c0_33, %c0_34] : memref<1x8x8x128xf32, #tpu.memory_space<vmem>>, vector<1x1x8x128xf32>
    %85 = vector.shape_cast %84 : vector<1x1x8x128xf32> to vector<8x128xf32>
    %86 = vector.shape_cast %82 : vector<8x128xf32> to vector<1x1x8x128xf32>
    tpu.vector_store %arg6[%c0_32, %83, %c0_33, %c0_34], %86 {strides = array<i32>} : memref<1x8x8x128xf32, #tpu.memory_space<vmem>>, vector<1x1x8x128xf32>,
    %c2_i32 = arith.constant 2 : i32
    %c8_i32_35 = arith.constant 8 : i32
    %87 = arith.muli %c2_i32, %c8_i32_35 : i32
    %88 = tpu.assume_multiple %87, 8 : i32
    %89 = arith.index_cast %88 : i32 to index
    %c0_36 = arith.constant 0 : index
    %90 = vector.load %arg11[%89, %c0_36] : memref<64x512xf32, #tpu.memory_space<vmem>>, vector<8x512xf32>
    %91 = arith.truncf %82 : vector<8x128xf32> to vector<8x128xbf16>
    %cst_37 = arith.constant dense<0.000000e+00> : vector<8x512xf32>
    %92 = tpu.matmul %91, %12, %cst_37 {dimension_numbers = #tpu.dot_dimension_numbers<[1], [0], [0], [1], [0, 0, 1, 1], [], []>} : vector<8x128xbf16>, vector<128x512xbf16>, vector<8x512xf32> -> vector<8x512xf32>
    %93 = arith.addf %90, %92 : vector<8x512xf32>
    %94 = vector.extract_strided_slice %93 {offsets = [0, 0], sizes = [8, 128], strides = [1, 1]} : vector<8x512xf32> to vector<8x128xf32>
    %95 = arith.negf %94 : vector<8x128xf32>
    %96 = math.exp %95 : vector<8x128xf32>
    %cst_38 = arith.constant 1.000000e+00 : f32
    %97 = vector.broadcast %cst_38 : f32 to vector<8x128xf32>
    %98 = arith.addf %97, %96 : vector<8x128xf32>
    %99 = arith.divf %97, %98 : vector<8x128xf32>
    %100 = vector.extract_strided_slice %93 {offsets = [0, 128], sizes = [8, 128], strides = [1, 1]} : vector<8x512xf32> to vector<8x128xf32>
    %101 = arith.negf %100 : vector<8x128xf32>
    %102 = math.exp %101 : vector<8x128xf32>
    %cst_39 = arith.constant 1.000000e+00 : f32
    %103 = vector.broadcast %cst_39 : f32 to vector<8x128xf32>
    %104 = arith.addf %103, %102 : vector<8x128xf32>
    %105 = arith.divf %103, %104 : vector<8x128xf32>
    %106 = vector.extract_strided_slice %93 {offsets = [0, 256], sizes = [8, 128], strides = [1, 1]} : vector<8x512xf32> to vector<8x128xf32>
    %107 = math.tanh %106 : vector<8x128xf32>
    %108 = vector.extract_strided_slice %93 {offsets = [0, 384], sizes = [8, 128], strides = [1, 1]} : vector<8x512xf32> to vector<8x128xf32>
    %109 = arith.negf %108 : vector<8x128xf32>
    %110 = math.exp %109 : vector<8x128xf32>
    %cst_40 = arith.constant 1.000000e+00 : f32
    %111 = vector.broadcast %cst_40 : f32 to vector<8x128xf32>
    %112 = arith.addf %111, %110 : vector<8x128xf32>
    %113 = arith.divf %111, %112 : vector<8x128xf32>
    %114 = arith.mulf %105, %80 : vector<8x128xf32>
    %115 = arith.mulf %99, %107 : vector<8x128xf32>
    %116 = arith.addf %114, %115 : vector<8x128xf32>
    %117 = math.tanh %116 : vector<8x128xf32>
    %118 = arith.mulf %113, %117 : vector<8x128xf32>
    %c0_41 = arith.constant 0 : index
    %119 = arith.index_cast %c2_i32 : i32 to index
    %c0_42 = arith.constant 0 : index
    %c0_43 = arith.constant 0 : index
    %120 = vector.load %arg6[%c0_41, %119, %c0_42, %c0_43] : memref<1x8x8x128xf32, #tpu.memory_space<vmem>>, vector<1x1x8x128xf32>
    %121 = vector.shape_cast %120 : vector<1x1x8x128xf32> to vector<8x128xf32>
    %122 = vector.shape_cast %118 : vector<8x128xf32> to vector<1x1x8x128xf32>
    tpu.vector_store %arg6[%c0_41, %119, %c0_42, %c0_43], %122 {strides = array<i32>} : memref<1x8x8x128xf32, #tpu.memory_space<vmem>>, vector<1x1x8x128xf32>,
    %c3_i32 = arith.constant 3 : i32
    %c8_i32_44 = arith.constant 8 : i32
    %123 = arith.muli %c3_i32, %c8_i32_44 : i32
    %124 = tpu.assume_multiple %123, 8 : i32
    %125 = arith.index_cast %124 : i32 to index
    %c0_45 = arith.constant 0 : index
    %126 = vector.load %arg11[%125, %c0_45] : memref<64x512xf32, #tpu.memory_space<vmem>>, vector<8x512xf32>
    %127 = arith.truncf %118 : vector<8x128xf32> to vector<8x128xbf16>
    %cst_46 = arith.constant dense<0.000000e+00> : vector<8x512xf32>
    %128 = tpu.matmul %127, %12, %cst_46 {dimension_numbers = #tpu.dot_dimension_numbers<[1], [0], [0], [1], [0, 0, 1, 1], [], []>} : vector<8x128xbf16>, vector<128x512xbf16>, vector<8x512xf32> -> vector<8x512xf32>
    %129 = arith.addf %126, %128 : vector<8x512xf32>
    %130 = vector.extract_strided_slice %129 {offsets = [0, 0], sizes = [8, 128], strides = [1, 1]} : vector<8x512xf32> to vector<8x128xf32>
    %131 = arith.negf %130 : vector<8x128xf32>
    %132 = math.exp %131 : vector<8x128xf32>
    %cst_47 = arith.constant 1.000000e+00 : f32
    %133 = vector.broadcast %cst_47 : f32 to vector<8x128xf32>
    %134 = arith.addf %133, %132 : vector<8x128xf32>
    %135 = arith.divf %133, %134 : vector<8x128xf32>
    %136 = vector.extract_strided_slice %129 {offsets = [0, 128], sizes = [8, 128], strides = [1, 1]} : vector<8x512xf32> to vector<8x128xf32>
    %137 = arith.negf %136 : vector<8x128xf32>
    %138 = math.exp %137 : vector<8x128xf32>
    %cst_48 = arith.constant 1.000000e+00 : f32
    %139 = vector.broadcast %cst_48 : f32 to vector<8x128xf32>
    %140 = arith.addf %139, %138 : vector<8x128xf32>
    %141 = arith.divf %139, %140 : vector<8x128xf32>
    %142 = vector.extract_strided_slice %129 {offsets = [0, 256], sizes = [8, 128], strides = [1, 1]} : vector<8x512xf32> to vector<8x128xf32>
    %143 = math.tanh %142 : vector<8x128xf32>
    %144 = vector.extract_strided_slice %129 {offsets = [0, 384], sizes = [8, 128], strides = [1, 1]} : vector<8x512xf32> to vector<8x128xf32>
    %145 = arith.negf %144 : vector<8x128xf32>
    %146 = math.exp %145 : vector<8x128xf32>
    %cst_49 = arith.constant 1.000000e+00 : f32
    %147 = vector.broadcast %cst_49 : f32 to vector<8x128xf32>
    %148 = arith.addf %147, %146 : vector<8x128xf32>
    %149 = arith.divf %147, %148 : vector<8x128xf32>
    %150 = arith.mulf %141, %116 : vector<8x128xf32>
    %151 = arith.mulf %135, %143 : vector<8x128xf32>
    %152 = arith.addf %150, %151 : vector<8x128xf32>
    %153 = math.tanh %152 : vector<8x128xf32>
    %154 = arith.mulf %149, %153 : vector<8x128xf32>
    %c0_50 = arith.constant 0 : index
    %155 = arith.index_cast %c3_i32 : i32 to index
    %c0_51 = arith.constant 0 : index
    %c0_52 = arith.constant 0 : index
    %156 = vector.load %arg6[%c0_50, %155, %c0_51, %c0_52] : memref<1x8x8x128xf32, #tpu.memory_space<vmem>>, vector<1x1x8x128xf32>
    %157 = vector.shape_cast %156 : vector<1x1x8x128xf32> to vector<8x128xf32>
    %158 = vector.shape_cast %154 : vector<8x128xf32> to vector<1x1x8x128xf32>
    tpu.vector_store %arg6[%c0_50, %155, %c0_51, %c0_52], %158 {strides = array<i32>} : memref<1x8x8x128xf32, #tpu.memory_space<vmem>>, vector<1x1x8x128xf32>,
    %c4_i32 = arith.constant 4 : i32
    %c8_i32_53 = arith.constant 8 : i32
    %159 = arith.muli %c4_i32, %c8_i32_53 : i32
    %160 = tpu.assume_multiple %159, 8 : i32
    %161 = arith.index_cast %160 : i32 to index
    %c0_54 = arith.constant 0 : index
    %162 = vector.load %arg11[%161, %c0_54] : memref<64x512xf32, #tpu.memory_space<vmem>>, vector<8x512xf32>
    %163 = arith.truncf %154 : vector<8x128xf32> to vector<8x128xbf16>
    %cst_55 = arith.constant dense<0.000000e+00> : vector<8x512xf32>
    %164 = tpu.matmul %163, %12, %cst_55 {dimension_numbers = #tpu.dot_dimension_numbers<[1], [0], [0], [1], [0, 0, 1, 1], [], []>} : vector<8x128xbf16>, vector<128x512xbf16>, vector<8x512xf32> -> vector<8x512xf32>
    %165 = arith.addf %162, %164 : vector<8x512xf32>
    %166 = vector.extract_strided_slice %165 {offsets = [0, 0], sizes = [8, 128], strides = [1, 1]} : vector<8x512xf32> to vector<8x128xf32>
    %167 = arith.negf %166 : vector<8x128xf32>
    %168 = math.exp %167 : vector<8x128xf32>
    %cst_56 = arith.constant 1.000000e+00 : f32
    %169 = vector.broadcast %cst_56 : f32 to vector<8x128xf32>
    %170 = arith.addf %169, %168 : vector<8x128xf32>
    %171 = arith.divf %169, %170 : vector<8x128xf32>
    %172 = vector.extract_strided_slice %165 {offsets = [0, 128], sizes = [8, 128], strides = [1, 1]} : vector<8x512xf32> to vector<8x128xf32>
    %173 = arith.negf %172 : vector<8x128xf32>
    %174 = math.exp %173 : vector<8x128xf32>
    %cst_57 = arith.constant 1.000000e+00 : f32
    %175 = vector.broadcast %cst_57 : f32 to vector<8x128xf32>
    %176 = arith.addf %175, %174 : vector<8x128xf32>
    %177 = arith.divf %175, %176 : vector<8x128xf32>
    %178 = vector.extract_strided_slice %165 {offsets = [0, 256], sizes = [8, 128], strides = [1, 1]} : vector<8x512xf32> to vector<8x128xf32>
    %179 = math.tanh %178 : vector<8x128xf32>
    %180 = vector.extract_strided_slice %165 {offsets = [0, 384], sizes = [8, 128], strides = [1, 1]} : vector<8x512xf32> to vector<8x128xf32>
    %181 = arith.negf %180 : vector<8x128xf32>
    %182 = math.exp %181 : vector<8x128xf32>
    %cst_58 = arith.constant 1.000000e+00 : f32
    %183 = vector.broadcast %cst_58 : f32 to vector<8x128xf32>
    %184 = arith.addf %183, %182 : vector<8x128xf32>
    %185 = arith.divf %183, %184 : vector<8x128xf32>
    %186 = arith.mulf %177, %152 : vector<8x128xf32>
    %187 = arith.mulf %171, %179 : vector<8x128xf32>
    %188 = arith.addf %186, %187 : vector<8x128xf32>
    %189 = math.tanh %188 : vector<8x128xf32>
    %190 = arith.mulf %185, %189 : vector<8x128xf32>
    %c0_59 = arith.constant 0 : index
    %191 = arith.index_cast %c4_i32 : i32 to index
    %c0_60 = arith.constant 0 : index
    %c0_61 = arith.constant 0 : index
    %192 = vector.load %arg6[%c0_59, %191, %c0_60, %c0_61] : memref<1x8x8x128xf32, #tpu.memory_space<vmem>>, vector<1x1x8x128xf32>
    %193 = vector.shape_cast %192 : vector<1x1x8x128xf32> to vector<8x128xf32>
    %194 = vector.shape_cast %190 : vector<8x128xf32> to vector<1x1x8x128xf32>
    tpu.vector_store %arg6[%c0_59, %191, %c0_60, %c0_61], %194 {strides = array<i32>} : memref<1x8x8x128xf32, #tpu.memory_space<vmem>>, vector<1x1x8x128xf32>,
    %c5_i32 = arith.constant 5 : i32
    %c8_i32_62 = arith.constant 8 : i32
    %195 = arith.muli %c5_i32, %c8_i32_62 : i32
    %196 = tpu.assume_multiple %195, 8 : i32
    %197 = arith.index_cast %196 : i32 to index
    %c0_63 = arith.constant 0 : index
    %198 = vector.load %arg11[%197, %c0_63] : memref<64x512xf32, #tpu.memory_space<vmem>>, vector<8x512xf32>
    %199 = arith.truncf %190 : vector<8x128xf32> to vector<8x128xbf16>
    %cst_64 = arith.constant dense<0.000000e+00> : vector<8x512xf32>
    %200 = tpu.matmul %199, %12, %cst_64 {dimension_numbers = #tpu.dot_dimension_numbers<[1], [0], [0], [1], [0, 0, 1, 1], [], []>} : vector<8x128xbf16>, vector<128x512xbf16>, vector<8x512xf32> -> vector<8x512xf32>
    %201 = arith.addf %198, %200 : vector<8x512xf32>
    %202 = vector.extract_strided_slice %201 {offsets = [0, 0], sizes = [8, 128], strides = [1, 1]} : vector<8x512xf32> to vector<8x128xf32>
    %203 = arith.negf %202 : vector<8x128xf32>
    %204 = math.exp %203 : vector<8x128xf32>
    %cst_65 = arith.constant 1.000000e+00 : f32
    %205 = vector.broadcast %cst_65 : f32 to vector<8x128xf32>
    %206 = arith.addf %205, %204 : vector<8x128xf32>
    %207 = arith.divf %205, %206 : vector<8x128xf32>
    %208 = vector.extract_strided_slice %201 {offsets = [0, 128], sizes = [8, 128], strides = [1, 1]} : vector<8x512xf32> to vector<8x128xf32>
    %209 = arith.negf %208 : vector<8x128xf32>
    %210 = math.exp %209 : vector<8x128xf32>
    %cst_66 = arith.constant 1.000000e+00 : f32
    %211 = vector.broadcast %cst_66 : f32 to vector<8x128xf32>
    %212 = arith.addf %211, %210 : vector<8x128xf32>
    %213 = arith.divf %211, %212 : vector<8x128xf32>
    %214 = vector.extract_strided_slice %201 {offsets = [0, 256], sizes = [8, 128], strides = [1, 1]} : vector<8x512xf32> to vector<8x128xf32>
    %215 = math.tanh %214 : vector<8x128xf32>
    %216 = vector.extract_strided_slice %201 {offsets = [0, 384], sizes = [8, 128], strides = [1, 1]} : vector<8x512xf32> to vector<8x128xf32>
    %217 = arith.negf %216 : vector<8x128xf32>
    %218 = math.exp %217 : vector<8x128xf32>
    %cst_67 = arith.constant 1.000000e+00 : f32
    %219 = vector.broadcast %cst_67 : f32 to vector<8x128xf32>
    %220 = arith.addf %219, %218 : vector<8x128xf32>
    %221 = arith.divf %219, %220 : vector<8x128xf32>
    %222 = arith.mulf %213, %188 : vector<8x128xf32>
    %223 = arith.mulf %207, %215 : vector<8x128xf32>
    %224 = arith.addf %222, %223 : vector<8x128xf32>
    %225 = math.tanh %224 : vector<8x128xf32>
    %226 = arith.mulf %221, %225 : vector<8x128xf32>
    %c0_68 = arith.constant 0 : index
    %227 = arith.index_cast %c5_i32 : i32 to index
    %c0_69 = arith.constant 0 : index
    %c0_70 = arith.constant 0 : index
    %228 = vector.load %arg6[%c0_68, %227, %c0_69, %c0_70] : memref<1x8x8x128xf32, #tpu.memory_space<vmem>>, vector<1x1x8x128xf32>
    %229 = vector.shape_cast %228 : vector<1x1x8x128xf32> to vector<8x128xf32>
    %230 = vector.shape_cast %226 : vector<8x128xf32> to vector<1x1x8x128xf32>
    tpu.vector_store %arg6[%c0_68, %227, %c0_69, %c0_70], %230 {strides = array<i32>} : memref<1x8x8x128xf32, #tpu.memory_space<vmem>>, vector<1x1x8x128xf32>,
    %c6_i32 = arith.constant 6 : i32
    %c8_i32_71 = arith.constant 8 : i32
    %231 = arith.muli %c6_i32, %c8_i32_71 : i32
    %232 = tpu.assume_multiple %231, 8 : i32
    %233 = arith.index_cast %232 : i32 to index
    %c0_72 = arith.constant 0 : index
    %234 = vector.load %arg11[%233, %c0_72] : memref<64x512xf32, #tpu.memory_space<vmem>>, vector<8x512xf32>
    %235 = arith.truncf %226 : vector<8x128xf32> to vector<8x128xbf16>
    %cst_73 = arith.constant dense<0.000000e+00> : vector<8x512xf32>
    %236 = tpu.matmul %235, %12, %cst_73 {dimension_numbers = #tpu.dot_dimension_numbers<[1], [0], [0], [1], [0, 0, 1, 1], [], []>} : vector<8x128xbf16>, vector<128x512xbf16>, vector<8x512xf32> -> vector<8x512xf32>
    %237 = arith.addf %234, %236 : vector<8x512xf32>
    %238 = vector.extract_strided_slice %237 {offsets = [0, 0], sizes = [8, 128], strides = [1, 1]} : vector<8x512xf32> to vector<8x128xf32>
    %239 = arith.negf %238 : vector<8x128xf32>
    %240 = math.exp %239 : vector<8x128xf32>
    %cst_74 = arith.constant 1.000000e+00 : f32
    %241 = vector.broadcast %cst_74 : f32 to vector<8x128xf32>
    %242 = arith.addf %241, %240 : vector<8x128xf32>
    %243 = arith.divf %241, %242 : vector<8x128xf32>
    %244 = vector.extract_strided_slice %237 {offsets = [0, 128], sizes = [8, 128], strides = [1, 1]} : vector<8x512xf32> to vector<8x128xf32>
    %245 = arith.negf %244 : vector<8x128xf32>
    %246 = math.exp %245 : vector<8x128xf32>
    %cst_75 = arith.constant 1.000000e+00 : f32
    %247 = vector.broadcast %cst_75 : f32 to vector<8x128xf32>
    %248 = arith.addf %247, %246 : vector<8x128xf32>
    %249 = arith.divf %247, %248 : vector<8x128xf32>
    %250 = vector.extract_strided_slice %237 {offsets = [0, 256], sizes = [8, 128], strides = [1, 1]} : vector<8x512xf32> to vector<8x128xf32>
    %251 = math.tanh %250 : vector<8x128xf32>
    %252 = vector.extract_strided_slice %237 {offsets = [0, 384], sizes = [8, 128], strides = [1, 1]} : vector<8x512xf32> to vector<8x128xf32>
    %253 = arith.negf %252 : vector<8x128xf32>
    %254 = math.exp %253 : vector<8x128xf32>
    %cst_76 = arith.constant 1.000000e+00 : f32
    %255 = vector.broadcast %cst_76 : f32 to vector<8x128xf32>
    %256 = arith.addf %255, %254 : vector<8x128xf32>
    %257 = arith.divf %255, %256 : vector<8x128xf32>
    %258 = arith.mulf %249, %224 : vector<8x128xf32>
    %259 = arith.mulf %243, %251 : vector<8x128xf32>
    %260 = arith.addf %258, %259 : vector<8x128xf32>
    %261 = math.tanh %260 : vector<8x128xf32>
    %262 = arith.mulf %257, %261 : vector<8x128xf32>
    %c0_77 = arith.constant 0 : index
    %263 = arith.index_cast %c6_i32 : i32 to index
    %c0_78 = arith.constant 0 : index
    %c0_79 = arith.constant 0 : index
    %264 = vector.load %arg6[%c0_77, %263, %c0_78, %c0_79] : memref<1x8x8x128xf32, #tpu.memory_space<vmem>>, vector<1x1x8x128xf32>
    %265 = vector.shape_cast %264 : vector<1x1x8x128xf32> to vector<8x128xf32>
    %266 = vector.shape_cast %262 : vector<8x128xf32> to vector<1x1x8x128xf32>
    tpu.vector_store %arg6[%c0_77, %263, %c0_78, %c0_79], %266 {strides = array<i32>} : memref<1x8x8x128xf32, #tpu.memory_space<vmem>>, vector<1x1x8x128xf32>,
    %c7_i32 = arith.constant 7 : i32
    %c8_i32_80 = arith.constant 8 : i32
    %267 = arith.muli %c7_i32, %c8_i32_80 : i32
    %268 = tpu.assume_multiple %267, 8 : i32
    %269 = arith.index_cast %268 : i32 to index
    %c0_81 = arith.constant 0 : index
    %270 = vector.load %arg11[%269, %c0_81] : memref<64x512xf32, #tpu.memory_space<vmem>>, vector<8x512xf32>
    %271 = arith.truncf %262 : vector<8x128xf32> to vector<8x128xbf16>
    %cst_82 = arith.constant dense<0.000000e+00> : vector<8x512xf32>
    %272 = tpu.matmul %271, %12, %cst_82 {dimension_numbers = #tpu.dot_dimension_numbers<[1], [0], [0], [1], [0, 0, 1, 1], [], []>} : vector<8x128xbf16>, vector<128x512xbf16>, vector<8x512xf32> -> vector<8x512xf32>
    %273 = arith.addf %270, %272 : vector<8x512xf32>
    %274 = vector.extract_strided_slice %273 {offsets = [0, 0], sizes = [8, 128], strides = [1, 1]} : vector<8x512xf32> to vector<8x128xf32>
    %275 = arith.negf %274 : vector<8x128xf32>
    %276 = math.exp %275 : vector<8x128xf32>
    %cst_83 = arith.constant 1.000000e+00 : f32
    %277 = vector.broadcast %cst_83 : f32 to vector<8x128xf32>
    %278 = arith.addf %277, %276 : vector<8x128xf32>
    %279 = arith.divf %277, %278 : vector<8x128xf32>
    %280 = vector.extract_strided_slice %273 {offsets = [0, 128], sizes = [8, 128], strides = [1, 1]} : vector<8x512xf32> to vector<8x128xf32>
    %281 = arith.negf %280 : vector<8x128xf32>
    %282 = math.exp %281 : vector<8x128xf32>
    %cst_84 = arith.constant 1.000000e+00 : f32
    %283 = vector.broadcast %cst_84 : f32 to vector<8x128xf32>
    %284 = arith.addf %283, %282 : vector<8x128xf32>
    %285 = arith.divf %283, %284 : vector<8x128xf32>
    %286 = vector.extract_strided_slice %273 {offsets = [0, 256], sizes = [8, 128], strides = [1, 1]} : vector<8x512xf32> to vector<8x128xf32>
    %287 = math.tanh %286 : vector<8x128xf32>
    %288 = vector.extract_strided_slice %273 {offsets = [0, 384], sizes = [8, 128], strides = [1, 1]} : vector<8x512xf32> to vector<8x128xf32>
    %289 = arith.negf %288 : vector<8x128xf32>
    %290 = math.exp %289 : vector<8x128xf32>
    %cst_85 = arith.constant 1.000000e+00 : f32
    %291 = vector.broadcast %cst_85 : f32 to vector<8x128xf32>
    %292 = arith.addf %291, %290 : vector<8x128xf32>
    %293 = arith.divf %291, %292 : vector<8x128xf32>
    %294 = arith.mulf %285, %260 : vector<8x128xf32>
    %295 = arith.mulf %279, %287 : vector<8x128xf32>
    %296 = arith.addf %294, %295 : vector<8x128xf32>
    %297 = math.tanh %296 : vector<8x128xf32>
    %298 = arith.mulf %293, %297 : vector<8x128xf32>
    %c0_86 = arith.constant 0 : index
    %299 = arith.index_cast %c7_i32 : i32 to index
    %c0_87 = arith.constant 0 : index
    %c0_88 = arith.constant 0 : index
    %300 = vector.load %arg6[%c0_86, %299, %c0_87, %c0_88] : memref<1x8x8x128xf32, #tpu.memory_space<vmem>>, vector<1x1x8x128xf32>
    %301 = vector.shape_cast %300 : vector<1x1x8x128xf32> to vector<8x128xf32>
    %302 = vector.shape_cast %298 : vector<8x128xf32> to vector<1x1x8x128xf32>
    tpu.vector_store %arg6[%c0_86, %299, %c0_87, %c0_88], %302 {strides = array<i32>} : memref<1x8x8x128xf32, #tpu.memory_space<vmem>>, vector<1x1x8x128xf32>,
    %c8_i32_89 = arith.constant 8 : i32
    %c0_90 = arith.constant 0 : index
    %c0_91 = arith.constant 0 : index
    %303 = vector.load %arg12[%c0_90, %c0_91] : memref<8x128xf32, #tpu.memory_space<vmem>>, vector<8x128xf32>
    tpu.vector_store %arg12[%c0_90, %c0_91], %298 {strides = array<i32>} : memref<8x128xf32, #tpu.memory_space<vmem>>, vector<8x128xf32>,
    %c0_92 = arith.constant 0 : index
    %c0_93 = arith.constant 0 : index
    %304 = vector.load %arg13[%c0_92, %c0_93] : memref<8x128xf32, #tpu.memory_space<vmem>>, vector<8x128xf32>
    tpu.vector_store %arg13[%c0_92, %c0_93], %296 {strides = array<i32>} : memref<8x128xf32, #tpu.memory_space<vmem>>, vector<8x128xf32>,
    %c0_i32_94 = arith.constant 0 : i32
    %305 = arith.cmpi eq, %arg1, %c0_i32_94 : i32
    %306 = arith.extui %305 : i1 to i32
    %c0_i32_95 = arith.constant 0 : i32
    %307 = arith.cmpi ne, %306, %c0_i32_95 : i32
    scf.if %307 {
      %c0_96 = arith.constant 0 : index
      %c0_97 = arith.constant 0 : index
      %c0_98 = arith.constant 0 : index
      %308 = vector.load %arg7[%c0_96, %c0_97, %c0_98] : memref<1x8x128xf32, #tpu.memory_space<vmem>>, vector<1x8x128xf32>
      %309 = vector.shape_cast %308 : vector<1x8x128xf32> to vector<8x128xf32>
      %310 = vector.shape_cast %298 : vector<8x128xf32> to vector<1x8x128xf32>
      tpu.vector_store %arg7[%c0_96, %c0_97, %c0_98], %310 {strides = array<i32>} : memref<1x8x128xf32, #tpu.memory_space<vmem>>, vector<1x8x128xf32>,
      %c0_99 = arith.constant 0 : index
      %c0_100 = arith.constant 0 : index
      %c0_101 = arith.constant 0 : index
      %311 = vector.load %arg8[%c0_99, %c0_100, %c0_101] : memref<1x8x128xf32, #tpu.memory_space<vmem>>, vector<1x8x128xf32>
      %312 = vector.shape_cast %311 : vector<1x8x128xf32> to vector<8x128xf32>
      %313 = vector.shape_cast %296 : vector<8x128xf32> to vector<1x8x128xf32>
      tpu.vector_store %arg8[%c0_99, %c0_100, %c0_101], %313 {strides = array<i32>} : memref<1x8x128xf32, #tpu.memory_space<vmem>>, vector<1x8x128xf32>,
    } else {
    }
    return
  }
  func.func @transform_0(%arg0: i32, %arg1: i32) -> (i32, i32, i32, i32) {
    %c0_i32 = arith.constant 0 : i32
    %c0_i32_0 = arith.constant 0 : i32
    %c0_i32_1 = arith.constant 0 : i32
    return %arg0, %arg1, %c0_i32, %c0_i32_0 : i32, i32, i32, i32
  }
  func.func @transform_1(%arg0: i32, %arg1: i32) -> (i32, i32, i32) {
    %c0_i32 = arith.constant 0 : i32
    %c0_i32_0 = arith.constant 0 : i32
    %c0_i32_1 = arith.constant 0 : i32
    return %arg0, %c0_i32, %c0_i32_0 : i32, i32, i32
  }
  func.func @transform_4(%arg0: i32, %arg1: i32) -> (i32, i32, i32, i32) {
    %c0_i32 = arith.constant 0 : i32
    %c0_i32_0 = arith.constant 0 : i32
    %c0_i32_1 = arith.constant 0 : i32
    return %arg0, %arg1, %c0_i32, %c0_i32_0 : i32, i32, i32, i32
  }
  func.func @transform_5(%arg0: i32, %arg1: i32) -> (i32, i32, i32) {
    %c0_i32 = arith.constant 0 : i32
    %c0_i32_0 = arith.constant 0 : i32
    %c0_i32_1 = arith.constant 0 : i32
    return %arg0, %c0_i32, %c0_i32_0 : i32, i32, i32
  }
  func.func @transform_6(%arg0: i32, %arg1: i32) -> (i32, i32, i32) {
    %c0_i32 = arith.constant 0 : i32
    %c0_i32_0 = arith.constant 0 : i32
    %c0_i32_1 = arith.constant 0 : i32
    return %arg0, %c0_i32, %c0_i32_0 : i32, i32, i32
  }
}

</mosaic_0001>

<llo_original>
// kernel: traversal_lstm_forward.1
$region0: #{traversal_lstm_forward.1}
  #allocation0 [shape = 'u32[]', space=smem, size = 0x4, offset = 0x4, fixed_abs, tag = 'smem constant byte address 0x4 - core index']
  #allocation1 [shape = 'u32[72,128]{1,0:T(1,128)}', space=vmem, size = 0x9000, scoped, tag = 'internal scratch']
  #allocation2 [shape = 'bf16[16,512]{1,0:T(8,128)(2,1)}', space=vmem, size = 0x4000, scoped, tag = 'scratch operand']
  #allocation3 [shape = 'bf16[128,512]{1,0:T(8,128)(2,1)}', space=vmem, size = 0x20000, scoped, tag = 'scratch operand']
  #allocation4 [shape = 'f32[64,512]{1,0:T(8,128)}', space=vmem, size = 0x20000, scoped, tag = 'scratch operand']
  #allocation5 [shape = 'f32[8,128]{1,0:T(8,128)}', space=vmem, size = 0x1000, scoped, tag = 'scratch operand']
  #allocation6 [shape = 'f32[8,128]{1,0:T(8,128)}', space=vmem, size = 0x1000, scoped, tag = 'scratch operand']
  #allocation7 [shape = 's32[2]{0}', space=sflag, size = 0x8, scoped, tag = 'scratch operand']
  #allocation8 [shape = 's32[]', space=sflag, size = 0x4, offset = 0, fixed_abs, tag = 'sflag constant byte address 0x0 - dummy sync flag']
  #allocation9 [shape = 's32[]', space=sflag, size = 0x4, offset = 0, fixed_abs, tag = 'sflag constant byte address 0x0 - dummy sync flag']
  %s0 = inlined_call_operand.vmem [shape: bf16[2,1,64,16], index: 0, kind: input, shape index: {}]
  %s1 = inlined_call_operand.vmem [shape: f32[2,1,512], index: 1, kind: input, shape index: {}]
  %s2 = inlined_call_operand.vmem [shape: bf16[2,16,512], index: 2, kind: input, shape index: {}]
  %s3 = inlined_call_operand.vmem [shape: bf16[2,128,512], index: 3, kind: input, shape index: {}]
  %s4 = inlined_call_operand.vmem [shape: f32[2,8,8,128], index: 4, kind: output, shape index: {0}]
  %s5 = inlined_call_operand.vmem [shape: f32[2,8,128], index: 5, kind: output, shape index: {1}]
  %s6 = inlined_call_operand.vmem [shape: f32[2,8,128], index: 6, kind: output, shape index: {2}]
  %7 = xla_tuple %s4, %s5, %s6
  %s8 = sld [smem:[#allocation0]]
  $region103: #{traversal_lstm_forward.1} parent=0
    _
  %s10 = ssub.s32 1, %s8
  %s11 = scalar_select 0, %s10, %s8
  loop: start=0, step=1, limit=4
  $region2: #{traversal_lstm_forward.1} parent=0 // loop_pre_header
    _
  $region3: #{traversal_lstm_forward.1} parent=0 // loop_header
    %s13 = sphi 0, %s17
    %p14 = scmp.ge.s32.totalorder %s13, 4
    %s20 = sphi 0, %s32
    %s21 = sphi 0, %s28
    %s22 = sphi 0, %s20
    %s23 = sphi 0, %s21
    %s24 = sphi 0, %s22
    %s25 = sphi 0, %s23
    %s37 = sphi 0, %s39
    %s40 = sphi 0, %s37
    %s41 = sphi 0, %s40
    %s57 = sphi 0, %s41
    %s63 = sphi 0, %s65
    %s66 = sphi 0, %s63
    %s67 = sphi 0, %s66
    %s83 = sphi 0, %s67
    %s91 = sphi 0, %s93
    %s94 = sphi 0, %s91
    %s95 = sphi 0, %s94
    %s111 = sphi 0, %s95
    %s117 = sphi 0, %s119
    %s120 = sphi 0, %s117
    %s121 = sphi 0, %s120
    %s137 = sphi 0, %s121
    %s143 = sphi 0, %s145
    %s146 = sphi 0, %s143
    %s147 = sphi 0, %s146
    %s163 = sphi 0, %s147
  $region4: #{traversal_lstm_forward.1} parent=0 // loop_header_branch
    %16 = sbr.rel (%p14) target = $region8
  $region5: #{traversal_lstm_forward.1} parent=0 // loop_body
    %s18 = ssub.s32 %s13, 1
    %s19 = ssub.s32 %s13, 2
    %s26 = sadd.s32 1, %s21
    %p27 = scmp.ge.s32.totalorder %s26, 1
    %s28 = scalar_select %p27, 0, %s26
    %s29 = sadd.s32 1, %s20
    %s30 = scalar_select %p27, %s29, %s20
    %p31 = scmp.ge.s32.totalorder %s30, 2
    %s32 = scalar_select %p31, 0, %s30
    %s33 = ssub.s32 %s20, %s32
    %s34 = ssub.s32 %s21, %s28
    %s35 = sor.u32 %s33, %s34
    %p36 = scmp.eq.s32.totalorder %s35, 0
    %s38 = sadd.s32 %s37, 1
    %s39 = scalar_select %p36, %s37, %s38
    %p42 = pneg %p36
    %p43 = scmp.eq.s32.totalorder %s13, 1
    %p44 = por %p42, %p43
    %p45 = scmp.ne.s32.totalorder %s37, %s40
    %p46 = scmp.eq.s32.totalorder %s13, 0
    %p47 = por %p45, %p46
    %p48 = scmp.ne.s32.totalorder %s37, %s40
    %p49 = scmp.eq.s32.totalorder %s18, 1
    %p50 = por %p48, %p49
    %p51 = scmp.ne.s32.totalorder %s40, %s41
    %p52 = scmp.eq.s32.totalorder %s18, 0
    %p53 = por %p51, %p52
    %p54 = scmp.ne.s32.totalorder %s40, %s41
    %p55 = scmp.eq.s32.totalorder %s19, 1
    %p56 = por %p54, %p55
    %p58 = scmp.ne.s32.totalorder %s41, %s57
    %p59 = scmp.eq.s32.totalorder %s19, 0
    %p60 = por %p58, %p59
    %s61 = ssub.s32 %s20, %s32
    %p62 = scmp.eq.s32.totalorder %s61, 0
    %s64 = sadd.s32 %s63, 1
    %s65 = scalar_select %p62, %s63, %s64
    %p68 = pneg %p62
    %p69 = scmp.eq.s32.totalorder %s13, 1
    %p70 = por %p68, %p69
    %p71 = scmp.ne.s32.totalorder %s63, %s66
    %p72 = scmp.eq.s32.totalorder %s13, 0
    %p73 = por %p71, %p72
    %p74 = scmp.ne.s32.totalorder %s63, %s66
    %p75 = scmp.eq.s32.totalorder %s18, 1
    %p76 = por %p74, %p75
    %p77 = scmp.ne.s32.totalorder %s66, %s67
    %p78 = scmp.eq.s32.totalorder %s18, 0
    %p79 = por %p77, %p78
    %p80 = scmp.ne.s32.totalorder %s66, %s67
    %p81 = scmp.eq.s32.totalorder %s19, 1
    %p82 = por %p80, %p81
    %p84 = scmp.ne.s32.totalorder %s67, %s83
    %p85 = scmp.eq.s32.totalorder %s19, 0
    %p86 = por %p84, %p85
    %s87 = ssub.s32 %s20, %s32
    %s88 = ssub.s32 %s21, %s28
    %s89 = sor.u32 %s87, %s88
    %p90 = scmp.eq.s32.totalorder %s89, 0
    %s92 = sadd.s32 %s91, 1
    %s93 = scalar_select %p90, %s91, %s92
    %p96 = pneg %p90
    %p97 = scmp.eq.s32.totalorder %s13, 1
    %p98 = por %p96, %p97
    %p99 = scmp.ne.s32.totalorder %s91, %s94
    %p100 = scmp.eq.s32.totalorder %s13, 0
    %p101 = por %p99, %p100
    %p102 = scmp.ne.s32.totalorder %s91, %s94
    %p103 = scmp.eq.s32.totalorder %s18, 1
    %p104 = por %p102, %p103
    %p105 = scmp.ne.s32.totalorder %s94, %s95
    %p106 = scmp.eq.s32.totalorder %s18, 0
    %p107 = por %p105, %p106
    %p108 = scmp.ne.s32.totalorder %s94, %s95
    %p109 = scmp.eq.s32.totalorder %s19, 1
    %p110 = por %p108, %p109
    %p112 = scmp.ne.s32.totalorder %s95, %s111
    %p113 = scmp.eq.s32.totalorder %s19, 0
    %p114 = por %p112, %p113
    %s115 = ssub.s32 %s20, %s32
    %p116 = scmp.eq.s32.totalorder %s115, 0
    %s118 = sadd.s32 %s117, 1
    %s119 = scalar_select %p116, %s117, %s118
    %p122 = pneg %p116
    %p123 = scmp.eq.s32.totalorder %s13, 1
    %p124 = por %p122, %p123
    %p125 = scmp.ne.s32.totalorder %s117, %s120
    %p126 = scmp.eq.s32.totalorder %s13, 0
    %p127 = por %p125, %p126
    %p128 = scmp.ne.s32.totalorder %s117, %s120
    %p129 = scmp.eq.s32.totalorder %s18, 1
    %p130 = por %p128, %p129
    %p131 = scmp.ne.s32.totalorder %s120, %s121
    %p132 = scmp.eq.s32.totalorder %s18, 0
    %p133 = por %p131, %p132
    %p134 = scmp.ne.s32.totalorder %s120, %s121
    %p135 = scmp.eq.s32.totalorder %s19, 1
    %p136 = por %p134, %p135
    %p138 = scmp.ne.s32.totalorder %s121, %s137
    %p139 = scmp.eq.s32.totalorder %s19, 0
    %p140 = por %p138, %p139
    %s141 = ssub.s32 %s20, %s32
    %p142 = scmp.eq.s32.totalorder %s141, 0
    %s144 = sadd.s32 %s143, 1
    %s145 = scalar_select %p142, %s143, %s144
    %p148 = pneg %p142
    %p149 = scmp.eq.s32.totalorder %s13, 1
    %p150 = por %p148, %p149
    %p151 = scmp.ne.s32.totalorder %s143, %s146
    %p152 = scmp.eq.s32.totalorder %s13, 0
    %p153 = por %p151, %p152
    %p154 = scmp.ne.s32.totalorder %s143, %s146
    %p155 = scmp.eq.s32.totalorder %s18, 1
    %p156 = por %p154, %p155
    %p157 = scmp.ne.s32.totalorder %s146, %s147
    %p158 = scmp.eq.s32.totalorder %s18, 0
    %p159 = por %p157, %p158
    %p160 = scmp.ne.s32.totalorder %s146, %s147
    %p161 = scmp.eq.s32.totalorder %s19, 1
    %p162 = por %p160, %p161
    %p164 = scmp.ne.s32.totalorder %s147, %s163
    %p165 = scmp.eq.s32.totalorder %s19, 0
    %p166 = por %p164, %p165
    %p167 = scmp.le.s32.totalorder 1, %s13
    %p168 = scmp.lt.s32.totalorder %s13, 3
    %p169 = pnand %p167, %p168
    %p170 = pneg %p169
    // Predicated region
    $region9: #{traversal_lstm_forward.1} parent=5 // pred_check
      _
    $region10: #{traversal_lstm_forward.1} parent=5 // pred_check_branch
      %172 = sbr.rel (%p169) target = $region12
    $region11: #{traversal_lstm_forward.1} parent=5 // pred_region
      %s173 = ssub.s32 %s13, 1
    $region12: #{traversal_lstm_forward.1} parent=5 // pred_fallthru
      _
    %p174 = scmp.lt.s32.totalorder %s13, 2
    // Predicated region
    $region13: #{traversal_lstm_forward.1} parent=5 // pred_check
      %p175 = pneg %p174
    $region14: #{traversal_lstm_forward.1} parent=5 // pred_check_branch
      %177 = sbr.rel (%p175) target = $region16
    $region15: #{traversal_lstm_forward.1} parent=5 // pred_region
      // Predicated region
      $region17: #{traversal_lstm_forward.1} parent=15 // pred_check
        %p178 = pneg %p47
      $region18: #{traversal_lstm_forward.1} parent=15 // pred_check_branch
        %180 = sbr.rel (%p178) target = $region20
      $region19: #{traversal_lstm_forward.1} parent=15 // pred_region
        %p181 = scmp.lt.s32.totalorder %s20, 1
        %s182 = scalar_select %p181, %s20, 1
        %p183 = scmp.lt.s32.totalorder %s21, 0
        %s184 = scalar_select %p183, %s21, 0
        %s185 = smul.addr %s184, 8
        %s186 = smul.addr %s182, 8
        %s187 = sadd.s32 %s185, %s186
        %s188 = smul.addr %s187, 4
        %s189 = scalar_lea.vmem %s0, %s188
      $region20: #{traversal_lstm_forward.1} parent=15 // pred_fallthru
        _
      // Predicated region
      $region21: #{traversal_lstm_forward.1} parent=15 // pred_check
        %p190 = pneg %p73
      $region22: #{traversal_lstm_forward.1} parent=15 // pred_check_branch
        %192 = sbr.rel (%p190) target = $region24
      $region23: #{traversal_lstm_forward.1} parent=15 // pred_region
        %p193 = scmp.lt.s32.totalorder %s20, 1
        %s194 = scalar_select %p193, %s20, 1
        %s195 = smul.addr %s194, 4
        %s196 = scalar_lea.vmem %s1, %s195
      $region24: #{traversal_lstm_forward.1} parent=15 // pred_fallthru
        _
    $region16: #{traversal_lstm_forward.1} parent=5 // pred_fallthru
      _
    %p197 = scmp.le.s32.totalorder 1, %s13
    %p198 = scmp.lt.s32.totalorder %s13, 3
    %p199 = pnand %p197, %p198
    %p200 = pneg %p199
    // Predicated region
    $region25: #{traversal_lstm_forward.1} parent=5 // pred_check
      _
    $region26: #{traversal_lstm_forward.1} parent=5 // pred_check_branch
      %202 = sbr.rel (%p199) target = $region28
    $region27: #{traversal_lstm_forward.1} parent=5 // pred_region
      %s203 = ssub.s32 %s13, 1
      %p204 = scmp.lt.s32.totalorder %s22, 1
      %s205 = scalar_select %p204, %s22, 1
      %p206 = scmp.lt.s32.totalorder %s23, 0
      %s207 = scalar_select %p206, %s23, 0
      %s208 = smul.addr %s207, 8
      %s209 = smul.addr %s205, 8
      %s210 = sadd.s32 %s208, %s209
      %s211 = smul.addr %s210, 4
      %s212 = scalar_lea.vmem %s0, %s211
      %p213 = pneg %p53
      %p214 = pneg %p50
      %p215 = scmp.lt.s32.totalorder %s22, 1
      %s216 = scalar_select %p215, %s22, 1
      %s217 = smul.addr %s216, 4
      %s218 = scalar_lea.vmem %s1, %s217
      %p219 = pneg %p79
      %p220 = pneg %p76
      %p221 = pneg %p107
      %p222 = pneg %p104
      %s223 = smul.u32 8, %s23
      %p224 = scmp.lt.s32.totalorder %s22, 1
      %s225 = scalar_select %p224, %s22, 1
      %p226 = scmp.lt.s32.totalorder %s223, 7
      %s227 = scalar_select %p226, %s223, 7
      %s228 = smul.addr %s225, 8
      %s229 = sadd.s32 %s227, %s228
      %s230 = smul.addr %s229, 8
      %s231 = scalar_lea.vmem %s4, %s230
      %p232 = pneg %p133
      %p233 = pneg %p130
      %p234 = scmp.lt.s32.totalorder %s22, 1
      %s235 = scalar_select %p234, %s22, 1
      %s236 = smul.addr %s235, 8
      %s237 = scalar_lea.vmem %s5, %s236
      %p238 = pneg %p159
      %p239 = pneg %p156
      %p240 = scmp.lt.s32.totalorder %s22, 1
      %s241 = scalar_select %p240, %s22, 1
      %s242 = smul.addr %s241, 8
      %s243 = scalar_lea.vmem %s6, %s242
      %p244 = scmp.lt.s32.totalorder %s22, 1
      %s245 = scalar_select %p244, %s22, 1
      %p246 = scmp.lt.s32.totalorder %s23, 0
      %s247 = scalar_select %p246, %s23, 0
      %s248 = smul.addr %s247, 8
      %s249 = smul.addr %s245, 8
      %s250 = sadd.s32 %s248, %s249
      %s251 = smul.addr %s250, 4
      %s252 = scalar_lea.vmem %s0, %s251
      %p253 = scmp.lt.s32.totalorder %s22, 1
      %s254 = scalar_select %p253, %s22, 1
      %s255 = smul.addr %s254, 4
      %s256 = scalar_lea.vmem %s1, %s255
      %s257 = smul.u32 8, %s23
      %p258 = scmp.lt.s32.totalorder %s22, 1
      %s259 = scalar_select %p258, %s22, 1
      %p260 = scmp.lt.s32.totalorder %s257, 7
      %s261 = scalar_select %p260, %s257, 7
      %s262 = smul.addr %s259, 8
      %s263 = sadd.s32 %s261, %s262
      %s264 = smul.addr %s263, 8
      %s265 = scalar_lea.vmem %s4, %s264
      %s266 = smul.u32 8, %s23
      %p267 = scmp.lt.s32.totalorder %s22, 1
      %s268 = scalar_select %p267, %s22, 1
      %s269 = smul.addr %s268, 8
      %s270 = scalar_lea.vmem %s5, %s269
      %p271 = scmp.lt.s32.totalorder %s22, 1
      %s272 = scalar_select %p271, %s22, 1
      %s273 = smul.addr %s272, 8
      %s274 = scalar_lea.vmem %s6, %s273
      %p276 = scmp.eq.s32.totalorder %s23, 0
      // Predicated region
      $region29: #{traversal_lstm_forward.1} parent=27 // pred_check
        %p277 = pneg %p276
      $region30: #{traversal_lstm_forward.1} parent=27 // pred_check_branch
        %279 = sbr.rel (%p277) target = $region32
      $region31: #{traversal_lstm_forward.1} parent=27 // pred_region
        %s280 = smul.u32 %s22, 8
        %s281 = smul.addr %s280, 4
        %s282 = scalar_lea.vmem %s2, %s281
        // Predicated region
        $region33: #{traversal_lstm_forward.1} parent=31 // pred_check
          _
        $region34: #{traversal_lstm_forward.1} parent=31 // pred_check_branch
          %284 = sbr.rel (0) target = $region36
        $region35: #{traversal_lstm_forward.1} parent=31 // pred_region
          loop: start=0, step=1, limit=1
          $region37: #{traversal_lstm_forward.1} parent=35 // loop_pre_header
            _
          $region38: #{traversal_lstm_forward.1} parent=35 // loop_header
            %s286 = sphi 0, %s290
            %p287 = scmp.ge.s32.totalorder %s286, 1
            %s291 = sphi %s282, %s282
            %s292 = sphi [#allocation2], [#allocation2]
          $region39: #{traversal_lstm_forward.1} parent=35 // loop_header_branch
            %289 = sbr.rel (%p287) target = $region43
          $region40: #{traversal_lstm_forward.1} parent=35 // loop_body
            %v293 = vld [vmem:[%s291] sm:$0xff]
            %294 = vst [vmem:[%s292] sm:$0xff] %v293
            %v295 = vld [vmem:[%s291 + $0x8] sm:$0xff]
            %296 = vst [vmem:[%s292 + $0x8] sm:$0xff] %v295
            %v297 = vld [vmem:[%s291 + $0x10] sm:$0xff]
            %298 = vst [vmem:[%s292 + $0x10] sm:$0xff] %v297
            %v299 = vld [vmem:[%s291 + $0x18] sm:$0xff]
            %300 = vst [vmem:[%s292 + $0x18] sm:$0xff] %v299
          $region41: #{traversal_lstm_forward.1} parent=35 // loop_footer
            %s290 = sadd.s32 1, %s286
          $region42: #{traversal_lstm_forward.1} parent=35 // loop_footer_branch
            %285 = sbr.rel target = $region38
          $region43: #{traversal_lstm_forward.1} parent=35 // loop_exit
            _
        $region36: #{traversal_lstm_forward.1} parent=31 // pred_fallthru
          _
        // Predicated region
        $region44: #{traversal_lstm_forward.1} parent=31 // pred_check
          _
        $region45: #{traversal_lstm_forward.1} parent=31 // pred_check_branch
          %302 = sbr.rel target = $region47
        $region46: #{traversal_lstm_forward.1} parent=31 // pred_region
          _
        $region47: #{traversal_lstm_forward.1} parent=31 // pred_fallthru
          _
        // Predicated region
        $region48: #{traversal_lstm_forward.1} parent=31 // pred_check
          _
        $region49: #{traversal_lstm_forward.1} parent=31 // pred_check_branch
          %305 = sbr.rel (0) target = $region51
        $region50: #{traversal_lstm_forward.1} parent=31 // pred_region
          %306 = vsyncadd [#allocation7], 512
        $region51: #{traversal_lstm_forward.1} parent=31 // pred_fallthru
          _
        %s307 = smul.u32 %s22, 64
        %s308 = smul.addr %s307, 4
        %s309 = scalar_lea.vmem %s3, %s308
        %s310 = scalar_lea.sflag [#allocation7], 1
        // Predicated region
        $region52: #{traversal_lstm_forward.1} parent=31 // pred_check
          _
        $region53: #{traversal_lstm_forward.1} parent=31 // pred_check_branch
          %312 = sbr.rel (0) target = $region55
        $region54: #{traversal_lstm_forward.1} parent=31 // pred_region
          loop: start=0, step=1, limit=1
          $region56: #{traversal_lstm_forward.1} parent=54 // loop_pre_header
            _
          $region57: #{traversal_lstm_forward.1} parent=54 // loop_header
            %s314 = sphi 0, %s318
            %p315 = scmp.ge.s32.totalorder %s314, 1
            %s319 = sphi %s309, %s309
            %s320 = sphi [#allocation3], [#allocation3]
          $region58: #{traversal_lstm_forward.1} parent=54 // loop_header_branch
            %317 = sbr.rel (%p315) target = $region62
          $region59: #{traversal_lstm_forward.1} parent=54 // loop_body
            %v321 = vld [vmem:[%s319] sm:$0xff]
            %322 = vst [vmem:[%s320] sm:$0xff] %v321
            %v323 = vld [vmem:[%s319 + $0x8] sm:$0xff]
            %324 = vst [vmem:[%s320 + $0x8] sm:$0xff] %v323
            %v325 = vld [vmem:[%s319 + $0x10] sm:$0xff]
            %326 = vst [vmem:[%s320 + $0x10] sm:$0xff] %v325
            %v327 = vld [vmem:[%s319 + $0x18] sm:$0xff]
            %328 = vst [vmem:[%s320 + $0x18] sm:$0xff] %v327
            %v329 = vld [vmem:[%s319 + $0x20] sm:$0xff]
            %330 = vst [vmem:[%s320 + $0x20] sm:$0xff] %v329
            %v331 = vld [vmem:[%s319 + $0x28] sm:$0xff]
            %332 = vst [vmem:[%s320 + $0x28] sm:$0xff] %v331
            %v333 = vld [vmem:[%s319 + $0x30] sm:$0xff]
            %334 = vst [vmem:[%s320 + $0x30] sm:$0xff] %v333
            %v335 = vld [vmem:[%s319 + $0x38] sm:$0xff]
            %336 = vst [vmem:[%s320 + $0x38] sm:$0xff] %v335
            %v337 = vld [vmem:[%s319 + $0x40] sm:$0xff]
            %338 = vst [vmem:[%s320 + $0x40] sm:$0xff] %v337
            %v339 = vld [vmem:[%s319 + $0x48] sm:$0xff]
            %340 = vst [vmem:[%s320 + $0x48] sm:$0xff] %v339
            %v341 = vld [vmem:[%s319 + $0x50] sm:$0xff]
            %342 = vst [vmem:[%s320 + $0x50] sm:$0xff] %v341
            %v343 = vld [vmem:[%s319 + $0x58] sm:$0xff]
            %344 = vst [vmem:[%s320 + $0x58] sm:$0xff] %v343
            %v345 = vld [vmem:[%s319 + $0x60] sm:$0xff]
            %346 = vst [vmem:[%s320 + $0x60] sm:$0xff] %v345
            %v347 = vld [vmem:[%s319 + $0x68] sm:$0xff]
            %348 = vst [vmem:[%s320 + $0x68] sm:$0xff] %v347
            %v349 = vld [vmem:[%s319 + $0x70] sm:$0xff]
            %350 = vst [vmem:[%s320 + $0x70] sm:$0xff] %v349
            %v351 = vld [vmem:[%s319 + $0x78] sm:$0xff]
            %352 = vst [vmem:[%s320 + $0x78] sm:$0xff] %v351
            %v353 = vld [vmem:[%s319 + $0x80] sm:$0xff]
            %354 = vst [vmem:[%s320 + $0x80] sm:$0xff] %v353
            %v355 = vld [vmem:[%s319 + $0x88] sm:$0xff]
            %356 = vst [vmem:[%s320 + $0x88] sm:$0xff] %v355
            %v357 = vld [vmem:[%s319 + $0x90] sm:$0xff]
            %358 = vst [vmem:[%s320 + $0x90] sm:$0xff] %v357
            %v359 = vld [vmem:[%s319 + $0x98] sm:$0xff]
            %360 = vst [vmem:[%s320 + $0x98] sm:$0xff] %v359
            %v361 = vld [vmem:[%s319 + $0xa0] sm:$0xff]
            %362 = vst [vmem:[%s320 + $0xa0] sm:$0xff] %v361
            %v363 = vld [vmem:[%s319 + $0xa8] sm:$0xff]
            %364 = vst [vmem:[%s320 + $0xa8] sm:$0xff] %v363
            %v365 = vld [vmem:[%s319 + $0xb0] sm:$0xff]
            %366 = vst [vmem:[%s320 + $0xb0] sm:$0xff] %v365
            %v367 = vld [vmem:[%s319 + $0xb8] sm:$0xff]
            %368 = vst [vmem:[%s320 + $0xb8] sm:$0xff] %v367
            %v369 = vld [vmem:[%s319 + $0xc0] sm:$0xff]
            %370 = vst [vmem:[%s320 + $0xc0] sm:$0xff] %v369
            %v371 = vld [vmem:[%s319 + $0xc8] sm:$0xff]
            %372 = vst [vmem:[%s320 + $0xc8] sm:$0xff] %v371
            %v373 = vld [vmem:[%s319 + $0xd0] sm:$0xff]
            %374 = vst [vmem:[%s320 + $0xd0] sm:$0xff] %v373
            %v375 = vld [vmem:[%s319 + $0xd8] sm:$0xff]
            %376 = vst [vmem:[%s320 + $0xd8] sm:$0xff] %v375
            %v377 = vld [vmem:[%s319 + $0xe0] sm:$0xff]
            %378 = vst [vmem:[%s320 + $0xe0] sm:$0xff] %v377
            %v379 = vld [vmem:[%s319 + $0xe8] sm:$0xff]
            %380 = vst [vmem:[%s320 + $0xe8] sm:$0xff] %v379
            %v381 = vld [vmem:[%s319 + $0xf0] sm:$0xff]
            %382 = vst [vmem:[%s320 + $0xf0] sm:$0xff] %v381
            %v383 = vld [vmem:[%s319 + $0xf8] sm:$0xff]
            %384 = vst [vmem:[%s320 + $0xf8] sm:$0xff] %v383
          $region60: #{traversal_lstm_forward.1} parent=54 // loop_footer
            %s318 = sadd.s32 1, %s314
          $region61: #{traversal_lstm_forward.1} parent=54 // loop_footer_branch
            %313 = sbr.rel target = $region57
          $region62: #{traversal_lstm_forward.1} parent=54 // loop_exit
            _
        $region55: #{traversal_lstm_forward.1} parent=31 // pred_fallthru
          _
        // Predicated region
        $region63: #{traversal_lstm_forward.1} parent=31 // pred_check
          _
        $region64: #{traversal_lstm_forward.1} parent=31 // pred_check_branch
          %386 = sbr.rel target = $region66
        $region65: #{traversal_lstm_forward.1} parent=31 // pred_region
          _
        $region66: #{traversal_lstm_forward.1} parent=31 // pred_fallthru
          _
        // Predicated region
        $region67: #{traversal_lstm_forward.1} parent=31 // pred_check
          _
        $region68: #{traversal_lstm_forward.1} parent=31 // pred_check_branch
          %389 = sbr.rel (0) target = $region70
        $region69: #{traversal_lstm_forward.1} parent=31 // pred_region
          %390 = vsyncadd %s310, 4096
        $region70: #{traversal_lstm_forward.1} parent=31 // pred_fallthru
          _
        %s391 = smul.u32 4, 2
        %s392 = smul.u32 %s391, 4
        %s393 = sshll.u32 %s392, 4
        %394 = dma.done [#allocation7], %s393
        %s395 = smul.u32 4, 16
        %s396 = smul.u32 %s395, 4
        %s397 = sshll.u32 %s396, 4
        %398 = dma.done %s310, %s397
        %399 = vst [vmem:[#allocation5] sm:$0xff] 0.0
        %400 = vst [vmem:[#allocation6] sm:$0xff] 0.0
      $region32: #{traversal_lstm_forward.1} parent=27 // pred_fallthru
        _
      %v401 = vld [vmem:[%s252] sm:$0xf]
      %v402 = vld [vmem:[%s252 + $0x4] sm:$0xf]
      %v403 = vld [vmem:[%s252 + $0x8] sm:$0xf]
      %v404 = vld [vmem:[%s252 + $0xc] sm:$0xf]
      %v405 = vld [vmem:[%s252 + $0x10] sm:$0xf]
      %v406 = vld [vmem:[%s252 + $0x14] sm:$0xf]
      %v407 = vld [vmem:[%s252 + $0x18] sm:$0xf]
      %v408 = vld [vmem:[%s252 + $0x1c] sm:$0xf]
      %v409 = vld [vmem:[#allocation2] sm:$0xff]
      %v410 = vld [vmem:[#allocation2 + $0x8] sm:$0xff]
      %v411 = vld [vmem:[#allocation2 + $0x10] sm:$0xff]
      %v412 = vld [vmem:[#allocation2 + $0x18] sm:$0xff]
      %v413 = vld [vmem:[%s256] sm:$0xf]
      %v415 = vperm.slane %v413, 0
      %v416 = vperm.slane %v413, 1
      %v417 = vperm.slane %v413, 2
      %v418 = vperm.slane %v413, 3
      %v431 = vunpack.c.l.b16 %v401
      %v432 = vunpack.c.l.b16 %v402
      %v433 = vunpack.c.l.b16 %v403
      %v434 = vunpack.c.l.b16 %v404
      %v435 = vunpack.c.l.b16 %v405
      %v436 = vunpack.c.l.b16 %v406
      %v437 = vunpack.c.l.b16 %v407
      %v438 = vunpack.c.l.b16 %v408
      %v439 = vpack.c.b16 %v432, %v431
      %v440 = vpack.c.b16 %v434, %v433
      %v441 = vpack.c.b16 %v436, %v435
      %v442 = vpack.c.b16 %v438, %v437
      %v447 = vunpack.c.l.b16 %v409
      %v448 = vunpack.c.h.b16 %v409
      %v449 = vunpack.c.l.b16 %v410
      %v450 = vunpack.c.h.b16 %v410
      %v451 = vunpack.c.l.b16 %v411
      %v452 = vunpack.c.h.b16 %v411
      %v453 = vunpack.c.l.b16 %v412
      %v454 = vunpack.c.h.b16 %v412
      %v455 = vpack.c.b16 %v451, %v447
      %v456 = vpack.c.b16 %v452, %v448
      %v457 = vpack.c.b16 %v453, %v449
      %v458 = vpack.c.b16 %v454, %v450
      %vm463 = vcmask 130048
      %v465 = vsel %vm463, %v439, 0
      %v468 = vsel %vm463, %v440, 0
      %v471 = vsel %vm463, %v441, 0
      %v474 = vsel %vm463, %v442, 0
      %476 = vmatpush.bf16.msra.mxu0 0
      %477 = vmatpush.bf16.msra.mxu0 0
      %478 = vmatpush.bf16.msra.mxu0 0
      %479 = vmatpush.bf16.msra.mxu0 0
      %480 = vmatpush.bf16.msra.mxu0 0
      %481 = vmatpush.bf16.msra.mxu0 0
      %482 = vmatpush.bf16.msra.mxu0 0
      %483 = vmatpush.bf16.msra.mxu0 %v455
      %484 = vmatmul.bf16.gmra.mxu0 %v465
      %v485 = vpop.f32.mrf.mxu0
      %v486 = vadd.f32 %v415, %v485
      %v487 = vpop.f32.mrf.mxu0
      %v488 = vadd.f32 %v415, %v487
      %489 = vmatmul.bf16.gmra.mxu0 %v468
      %v490 = vpop.f32.mrf.mxu0
      %v491 = vadd.f32 %v415, %v490
      %v492 = vpop.f32.mrf.mxu0
      %v493 = vadd.f32 %v415, %v492
      %494 = vmatmul.bf16.gmra.mxu0 %v471
      %v495 = vpop.f32.mrf.mxu0
      %v496 = vadd.f32 %v415, %v495
      %v497 = vpop.f32.mrf.mxu0
      %v498 = vadd.f32 %v415, %v497
      %499 = vmatmul.bf16.gmra.mxu0 %v474
      %v500 = vpop.f32.mrf.mxu0
      %v501 = vadd.f32 %v415, %v500
      %v502 = vpop.f32.mrf.mxu0
      %v503 = vadd.f32 %v415, %v502
      %504 = vdwg.mxu0
      %505 = vmatpush.bf16.msra.mxu0 0
      %506 = vmatpush.bf16.msra.mxu0 0
      %507 = vmatpush.bf16.msra.mxu0 0
      %508 = vmatpush.bf16.msra.mxu0 0
      %509 = vmatpush.bf16.msra.mxu0 0
      %510 = vmatpush.bf16.msra.mxu0 0
      %511 = vmatpush.bf16.msra.mxu0 0
      %512 = vmatpush.bf16.msra.mxu0 %v456
      %513 = vmatmul.bf16.gmra.mxu0 %v465
      %v514 = vpop.f32.mrf.mxu0
      %v515 = vadd.f32 %v416, %v514
      %v516 = vpop.f32.mrf.mxu0
      %v517 = vadd.f32 %v416, %v516
      %518 = vmatmul.bf16.gmra.mxu0 %v468
      %v519 = vpop.f32.mrf.mxu0
      %v520 = vadd.f32 %v416, %v519
      %v521 = vpop.f32.mrf.mxu0
      %v522 = vadd.f32 %v416, %v521
      %523 = vmatmul.bf16.gmra.mxu0 %v471
      %v524 = vpop.f32.mrf.mxu0
      %v525 = vadd.f32 %v416, %v524
      %v526 = vpop.f32.mrf.mxu0
      %v527 = vadd.f32 %v416, %v526
      %528 = vmatmul.bf16.gmra.mxu0 %v474
      %v529 = vpop.f32.mrf.mxu0
      %v530 = vadd.f32 %v416, %v529
      %v531 = vpop.f32.mrf.mxu0
      %v532 = vadd.f32 %v416, %v531
      %533 = vdwg.mxu0
      %534 = vmatpush.bf16.msra.mxu0 0
      %535 = vmatpush.bf16.msra.mxu0 0
      %536 = vmatpush.bf16.msra.mxu0 0
      %537 = vmatpush.bf16.msra.mxu0 0
      %538 = vmatpush.bf16.msra.mxu0 0
      %539 = vmatpush.bf16.msra.mxu0 0
      %540 = vmatpush.bf16.msra.mxu0 0
      %541 = vmatpush.bf16.msra.mxu0 %v457
      %542 = vmatmul.bf16.gmra.mxu0 %v465
      %v543 = vpop.f32.mrf.mxu0
      %v544 = vadd.f32 %v417, %v543
      %v545 = vpop.f32.mrf.mxu0
      %v546 = vadd.f32 %v417, %v545
      %547 = vmatmul.bf16.gmra.mxu0 %v468
      %v548 = vpop.f32.mrf.mxu0
      %v549 = vadd.f32 %v417, %v548
      %v550 = vpop.f32.mrf.mxu0
      %v551 = vadd.f32 %v417, %v550
      %552 = vmatmul.bf16.gmra.mxu0 %v471
      %v553 = vpop.f32.mrf.mxu0
      %v554 = vadd.f32 %v417, %v553
      %v555 = vpop.f32.mrf.mxu0
      %v556 = vadd.f32 %v417, %v555
      %557 = vmatmul.bf16.gmra.mxu0 %v474
      %v558 = vpop.f32.mrf.mxu0
      %v559 = vadd.f32 %v417, %v558
      %v560 = vpop.f32.mrf.mxu0
      %v561 = vadd.f32 %v417, %v560
      %562 = vdwg.mxu0
      %563 = vmatpush.bf16.msra.mxu0 0
      %564 = vmatpush.bf16.msra.mxu0 0
      %565 = vmatpush.bf16.msra.mxu0 0
      %566 = vmatpush.bf16.msra.mxu0 0
      %567 = vmatpush.bf16.msra.mxu0 0
      %568 = vmatpush.bf16.msra.mxu0 0
      %569 = vmatpush.bf16.msra.mxu0 0
      %570 = vmatpush.bf16.msra.mxu0 %v458
      %571 = vmatmul.bf16.gmra.mxu0 %v465
      %v572 = vpop.f32.mrf.mxu0
      %v573 = vadd.f32 %v418, %v572
      %v574 = vpop.f32.mrf.mxu0
      %v575 = vadd.f32 %v418, %v574
      %576 = vmatmul.bf16.gmra.mxu0 %v468
      %v577 = vpop.f32.mrf.mxu0
      %v578 = vadd.f32 %v418, %v577
      %v579 = vpop.f32.mrf.mxu0
      %v580 = vadd.f32 %v418, %v579
      %581 = vmatmul.bf16.gmra.mxu0 %v471
      %v582 = vpop.f32.mrf.mxu0
      %v583 = vadd.f32 %v418, %v582
      %v584 = vpop.f32.mrf.mxu0
      %v585 = vadd.f32 %v418, %v584
      %586 = vmatmul.bf16.gmra.mxu0 %v474
      %v587 = vpop.f32.mrf.mxu0
      %v588 = vadd.f32 %v418, %v587
      %v589 = vpop.f32.mrf.mxu0
      %v590 = vadd.f32 %v418, %v589
      %591 = vdwg.mxu0
      %592 = vst [vmem:[#allocation4] sm:$0xff] %v486
      %593 = vst [vmem:[#allocation4 + $0x8] sm:$0xff] %v515
      %594 = vst [vmem:[#allocation4 + $0x10] sm:$0xff] %v544
      %595 = vst [vmem:[#allocation4 + $0x18] sm:$0xff] %v573
      %596 = vst [vmem:[#allocation4 + $0x20] sm:$0xff] %v488
      %597 = vst [vmem:[#allocation4 + $0x28] sm:$0xff] %v517
      %598 = vst [vmem:[#allocation4 + $0x30] sm:$0xff] %v546
      %599 = vst [vmem:[#allocation4 + $0x38] sm:$0xff] %v575
      %600 = vst [vmem:[#allocation4 + $0x40] sm:$0xff] %v491
      %601 = vst [vmem:[#allocation4 + $0x48] sm:$0xff] %v520
      %602 = vst [vmem:[#allocation4 + $0x50] sm:$0xff] %v549
      %603 = vst [vmem:[#allocation4 + $0x58] sm:$0xff] %v578
      %604 = vst [vmem:[#allocation4 + $0x60] sm:$0xff] %v493
      %605 = vst [vmem:[#allocation4 + $0x68] sm:$0xff] %v522
      %606 = vst [vmem:[#allocation4 + $0x70] sm:$0xff] %v551
      %607 = vst [vmem:[#allocation4 + $0x78] sm:$0xff] %v580
      %608 = vst [vmem:[#allocation4 + $0x80] sm:$0xff] %v496
      %609 = vst [vmem:[#allocation4 + $0x88] sm:$0xff] %v525
      %610 = vst [vmem:[#allocation4 + $0x90] sm:$0xff] %v554
      %611 = vst [vmem:[#allocation4 + $0x98] sm:$0xff] %v583
      %612 = vst [vmem:[#allocation4 + $0xa0] sm:$0xff] %v498
      %613 = vst [vmem:[#allocation4 + $0xa8] sm:$0xff] %v527
      %614 = vst [vmem:[#allocation4 + $0xb0] sm:$0xff] %v556
      %615 = vst [vmem:[#allocation4 + $0xb8] sm:$0xff] %v585
      %616 = vst [vmem:[#allocation4 + $0xc0] sm:$0xff] %v501
      %617 = vst [vmem:[#allocation4 + $0xc8] sm:$0xff] %v530
      %618 = vst [vmem:[#allocation4 + $0xd0] sm:$0xff] %v559
      %619 = vst [vmem:[#allocation4 + $0xd8] sm:$0xff] %v588
      %620 = vst [vmem:[#allocation4 + $0xe0] sm:$0xff] %v503
      %621 = vst [vmem:[#allocation4 + $0xe8] sm:$0xff] %v532
      %622 = vst [vmem:[#allocation4 + $0xf0] sm:$0xff] %v561
      %623 = vst [vmem:[#allocation4 + $0xf8] sm:$0xff] %v590
      %v624 = vld [vmem:[#allocation3] sm:$0xff]
      %v625 = vld [vmem:[#allocation3 + $0x8] sm:$0xff]
      %v626 = vld [vmem:[#allocation3 + $0x10] sm:$0xff]
      %v627 = vld [vmem:[#allocation3 + $0x18] sm:$0xff]
      %v628 = vld [vmem:[#allocation3 + $0x20] sm:$0xff]
      %v629 = vld [vmem:[#allocation3 + $0x28] sm:$0xff]
      %v630 = vld [vmem:[#allocation3 + $0x30] sm:$0xff]
      %v631 = vld [vmem:[#allocation3 + $0x38] sm:$0xff]
      %v632 = vld [vmem:[#allocation3 + $0x40] sm:$0xff]
      %v633 = vld [vmem:[#allocation3 + $0x48] sm:$0xff]
      %v634 = vld [vmem:[#allocation3 + $0x50] sm:$0xff]
      %v635 = vld [vmem:[#allocation3 + $0x58] sm:$0xff]
      %v636 = vld [vmem:[#allocation3 + $0x60] sm:$0xff]
      %v637 = vld [vmem:[#allocation3 + $0x68] sm:$0xff]
      %v638 = vld [vmem:[#allocation3 + $0x70] sm:$0xff]
      %v639 = vld [vmem:[#allocation3 + $0x78] sm:$0xff]
      %v640 = vld [vmem:[#allocation3 + $0x80] sm:$0xff]
      %v641 = vld [vmem:[#allocation3 + $0x88] sm:$0xff]
      %v642 = vld [vmem:[#allocation3 + $0x90] sm:$0xff]
      %v643 = vld [vmem:[#allocation3 + $0x98] sm:$0xff]
      %v644 = vld [vmem:[#allocation3 + $0xa0] sm:$0xff]
      %v645 = vld [vmem:[#allocation3 + $0xa8] sm:$0xff]
      %v646 = vld [vmem:[#allocation3 + $0xb0] sm:$0xff]
      %v647 = vld [vmem:[#allocation3 + $0xb8] sm:$0xff]
      %v648 = vld [vmem:[#allocation3 + $0xc0] sm:$0xff]
      %v649 = vld [vmem:[#allocation3 + $0xc8] sm:$0xff]
      %v650 = vld [vmem:[#allocation3 + $0xd0] sm:$0xff]
      %v651 = vld [vmem:[#allocation3 + $0xd8] sm:$0xff]
      %v652 = vld [vmem:[#allocation3 + $0xe0] sm:$0xff]
      %v653 = vld [vmem:[#allocation3 + $0xe8] sm:$0xff]
      %v654 = vld [vmem:[#allocation3 + $0xf0] sm:$0xff]
      %v655 = vld [vmem:[#allocation3 + $0xf8] sm:$0xff]
      %v656 = vld [vmem:[#allocation5] sm:$0xff]
      %v657 = vld [vmem:[#allocation6] sm:$0xff]
      %s658 = smul.u32 0, 4
      %s659 = smul.addr %s658, 8
      %s660 = scalar_lea.vmem [#allocation4], %s659
      %v661 = vld [vmem:[%s660] sm:$0xff]
      %v662 = vld [vmem:[%s660 + $0x8] sm:$0xff]
      %v663 = vld [vmem:[%s660 + $0x10] sm:$0xff]
      %v664 = vld [vmem:[%s660 + $0x18] sm:$0xff]
      %v665 = vpack.c.bf16 %v656, %v656
      %v698 = vunpack.c.l.b16 %v624
      %v699 = vunpack.c.h.b16 %v624
      %v700 = vunpack.c.l.b16 %v625
      %v701 = vunpack.c.h.b16 %v625
      %v702 = vunpack.c.l.b16 %v626
      %v703 = vunpack.c.h.b16 %v626
      %v704 = vunpack.c.l.b16 %v627
      %v705 = vunpack.c.h.b16 %v627
      %v706 = vunpack.c.l.b16 %v628
      %v707 = vunpack.c.h.b16 %v628
      %v708 = vunpack.c.l.b16 %v629
      %v709 = vunpack.c.h.b16 %v629
      %v710 = vunpack.c.l.b16 %v630
      %v711 = vunpack.c.h.b16 %v630
      %v712 = vunpack.c.l.b16 %v631
      %v713 = vunpack.c.h.b16 %v631
      %v714 = vunpack.c.l.b16 %v632
      %v715 = vunpack.c.h.b16 %v632
      %v716 = vunpack.c.l.b16 %v633
      %v717 = vunpack.c.h.b16 %v633
      %v718 = vunpack.c.l.b16 %v634
      %v719 = vunpack.c.h.b16 %v634
      %v720 = vunpack.c.l.b16 %v635
      %v721 = vunpack.c.h.b16 %v635
      %v722 = vunpack.c.l.b16 %v636
      %v723 = vunpack.c.h.b16 %v636
      %v724 = vunpack.c.l.b16 %v637
      %v725 = vunpack.c.h.b16 %v637
      %v726 = vunpack.c.l.b16 %v638
      %v727 = vunpack.c.h.b16 %v638
      %v728 = vunpack.c.l.b16 %v639
      %v729 = vunpack.c.h.b16 %v639
      %v730 = vunpack.c.l.b16 %v640
      %v731 = vunpack.c.h.b16 %v640
      %v732 = vunpack.c.l.b16 %v641
      %v733 = vunpack.c.h.b16 %v641
      %v734 = vunpack.c.l.b16 %v642
      %v735 = vunpack.c.h.b16 %v642
      %v736 = vunpack.c.l.b16 %v643
      %v737 = vunpack.c.h.b16 %v643
      %v738 = vunpack.c.l.b16 %v644
      %v739 = vunpack.c.h.b16 %v644
      %v740 = vunpack.c.l.b16 %v645
      %v741 = vunpack.c.h.b16 %v645
      %v742 = vunpack.c.l.b16 %v646
      %v743 = vunpack.c.h.b16 %v646
      %v744 = vunpack.c.l.b16 %v647
      %v745 = vunpack.c.h.b16 %v647
      %v746 = vunpack.c.l.b16 %v648
      %v747 = vunpack.c.h.b16 %v648
      %v748 = vunpack.c.l.b16 %v649
      %v749 = vunpack.c.h.b16 %v649
      %v750 = vunpack.c.l.b16 %v650
      %v751 = vunpack.c.h.b16 %v650
      %v752 = vunpack.c.l.b16 %v651
      %v753 = vunpack.c.h.b16 %v651
      %v754 = vunpack.c.l.b16 %v652
      %v755 = vunpack.c.h.b16 %v652
      %v756 = vunpack.c.l.b16 %v653
      %v757 = vunpack.c.h.b16 %v653
      %v758 = vunpack.c.l.b16 %v654
      %v759 = vunpack.c.h.b16 %v654
      %v760 = vunpack.c.l.b16 %v655
      %v761 = vunpack.c.h.b16 %v655
      %v762 = vpack.c.b16 %v702, %v698
      %v763 = vpack.c.b16 %v703, %v699
      %v764 = vpack.c.b16 %v704, %v700
      %v765 = vpack.c.b16 %v705, %v701
      %v766 = vpack.c.b16 %v710, %v706
      %v767 = vpack.c.b16 %v711, %v707
      %v768 = vpack.c.b16 %v712, %v708
      %v769 = vpack.c.b16 %v713, %v709
      %v770 = vpack.c.b16 %v718, %v714
      %v771 = vpack.c.b16 %v719, %v715
      %v772 = vpack.c.b16 %v720, %v716
      %v773 = vpack.c.b16 %v721, %v717
      %v774 = vpack.c.b16 %v726, %v722
      %v775 = vpack.c.b16 %v727, %v723
      %v776 = vpack.c.b16 %v728, %v724
      %v777 = vpack.c.b16 %v729, %v725
      %v778 = vpack.c.b16 %v734, %v730
      %v779 = vpack.c.b16 %v735, %v731
      %v780 = vpack.c.b16 %v736, %v732
      %v781 = vpack.c.b16 %v737, %v733
      %v782 = vpack.c.b16 %v742, %v738
      %v783 = vpack.c.b16 %v743, %v739
      %v784 = vpack.c.b16 %v744, %v740
      %v785 = vpack.c.b16 %v745, %v741
      %v786 = vpack.c.b16 %v750, %v746
      %v787 = vpack.c.b16 %v751, %v747
      %v788 = vpack.c.b16 %v752, %v748
      %v789 = vpack.c.b16 %v753, %v749
      %v790 = vpack.c.b16 %v758, %v754
      %v791 = vpack.c.b16 %v759, %v755
      %v792 = vpack.c.b16 %v760, %v756
      %v793 = vpack.c.b16 %v761, %v757
      %826 = vmatpush.bf16.msra.mxu0 %v790
      %827 = vmatpush.bf16.msra.mxu0 %v786
      %828 = vmatpush.bf16.msra.mxu0 %v782
      %829 = vmatpush.bf16.msra.mxu0 %v778
      %830 = vmatpush.bf16.msra.mxu0 %v774
      %831 = vmatpush.bf16.msra.mxu0 %v770
      %832 = vmatpush.bf16.msra.mxu0 %v766
      %833 = vmatpush.bf16.msra.mxu0 %v762
      %834 = vmatmul.bf16.gmra.mxu0 %v665
      %v835 = vpop.f32.mrf.mxu0
      %v836 = vadd.f32 0.0, %v835
      %v837 = vpop.f32.mrf.mxu0
      %838 = vdwg.mxu0
      %839 = vmatpush.bf16.msra.mxu0 %v791
      %840 = vmatpush.bf16.msra.mxu0 %v787
      %841 = vmatpush.bf16.msra.mxu0 %v783
      %842 = vmatpush.bf16.msra.mxu0 %v779
      %843 = vmatpush.bf16.msra.mxu0 %v775
      %844 = vmatpush.bf16.msra.mxu0 %v771
      %845 = vmatpush.bf16.msra.mxu0 %v767
      %846 = vmatpush.bf16.msra.mxu0 %v763
      %847 = vmatmul.bf16.gmra.mxu0 %v665
      %v848 = vpop.f32.mrf.mxu0
      %v849 = vadd.f32 0.0, %v848
      %v850 = vpop.f32.mrf.mxu0
      %851 = vdwg.mxu0
      %852 = vmatpush.bf16.msra.mxu0 %v792
      %853 = vmatpush.bf16.msra.mxu0 %v788
      %854 = vmatpush.bf16.msra.mxu0 %v784
      %855 = vmatpush.bf16.msra.mxu0 %v780
      %856 = vmatpush.bf16.msra.mxu0 %v776
      %857 = vmatpush.bf16.msra.mxu0 %v772
      %858 = vmatpush.bf16.msra.mxu0 %v768
      %859 = vmatpush.bf16.msra.mxu0 %v764
      %860 = vmatmul.bf16.gmra.mxu0 %v665
      %v861 = vpop.f32.mrf.mxu0
      %v862 = vadd.f32 0.0, %v861
      %v863 = vpop.f32.mrf.mxu0
      %864 = vdwg.mxu0
      %865 = vmatpush.bf16.msra.mxu0 %v793
      %866 = vmatpush.bf16.msra.mxu0 %v789
      %867 = vmatpush.bf16.msra.mxu0 %v785
      %868 = vmatpush.bf16.msra.mxu0 %v781
      %869 = vmatpush.bf16.msra.mxu0 %v777
      %870 = vmatpush.bf16.msra.mxu0 %v773
      %871 = vmatpush.bf16.msra.mxu0 %v769
      %872 = vmatpush.bf16.msra.mxu0 %v765
      %873 = vmatmul.bf16.gmra.mxu0 %v665
      %v874 = vpop.f32.mrf.mxu0
      %v875 = vadd.f32 0.0, %v874
      %v876 = vpop.f32.mrf.mxu0
      %877 = vdwg.mxu0
      %v878 = vadd.f32 %v661, %v836
      %v879 = vadd.f32 %v662, %v849
      %v880 = vadd.f32 %v663, %v862
      %v881 = vadd.f32 %v664, %v875
      %v882 = vxor.u32 %v878, 2147483648
      %v883 = vmul.f32 %v882, 1.442695
      %v884 = vpow.pop %v883
      %v885 = vadd.f32 %v884, 1.0
      %v886 = vrcp.pop %v885
      %v887 = vmul.f32 %v885, %v886
      %v888 = vsub.f32 1.0, %v887
      %v889 = vmul.f32 %v886, %v888
      %v890 = vadd.f32 %v886, %v889
      %vm891 = vweird.f32 %v885
      %vm892 = vweird.f32 %v886
      %vm893 = vmor %vm891, %vm892
      %v894 = vsel %vm893, %v886, %v890
      %v895 = vand.u32 2147483647, %v885
      %vm896 = vcmp.eq.f32.partialorder %v895, 8.507059e+37
      %v897 = vand.u32 %v885, 2147483648
      %v898 = vor.u32 1.1754944e-38, %v897
      %v899 = vsel %vm896, %v898, %v894
      %v900 = vmul.f32 1.0, %v899
      %v901 = vxor.u32 %v879, 2147483648
      %v902 = vmul.f32 %v901, 1.442695
      %v903 = vpow.pop %v902
      %v904 = vadd.f32 %v903, 1.0
      %v905 = vrcp.pop %v904
      %v906 = vmul.f32 %v904, %v905
      %v907 = vsub.f32 1.0, %v906
      %v908 = vmul.f32 %v905, %v907
      %v909 = vadd.f32 %v905, %v908
      %vm910 = vweird.f32 %v904
      %vm911 = vweird.f32 %v905
      %vm912 = vmor %vm910, %vm911
      %v913 = vsel %vm912, %v905, %v909
      %v914 = vand.u32 2147483647, %v904
      %vm915 = vcmp.eq.f32.partialorder %v914, 8.507059e+37
      %v916 = vand.u32 %v904, 2147483648
      %v917 = vor.u32 1.1754944e-38, %v916
      %v918 = vsel %vm915, %v917, %v913
      %v919 = vmul.f32 1.0, %v918
      %v920 = vtanh.pop %v880
      %v921 = vxor.u32 %v881, 2147483648
      %v922 = vmul.f32 %v921, 1.442695
      %v923 = vpow.pop %v922
      %v924 = vadd.f32 %v923, 1.0
      %v925 = vrcp.pop %v924
      %v926 = vmul.f32 %v924, %v925
      %v927 = vsub.f32 1.0, %v926
      %v928 = vmul.f32 %v925, %v927
      %v929 = vadd.f32 %v925, %v928
      %vm930 = vweird.f32 %v924
      %vm931 = vweird.f32 %v925
      %vm932 = vmor %vm930, %vm931
      %v933 = vsel %vm932, %v925, %v929
      %v934 = vand.u32 2147483647, %v924
      %vm935 = vcmp.eq.f32.partialorder %v934, 8.507059e+37
      %v936 = vand.u32 %v924, 2147483648
      %v937 = vor.u32 1.1754944e-38, %v936
      %v938 = vsel %vm935, %v937, %v933
      %v939 = vmul.f32 1.0, %v938
      %v940 = vmul.f32 %v919, %v657
      %v941 = vmul.f32 %v900, %v920
      %v942 = vadd.f32 %v940, %v941
      %v943 = vtanh.pop %v942
      %v944 = vmul.f32 %v939, %v943
      %945 = vst [vmem:[%s265] sm:$0xff] %v944
      %s946 = smul.u32 1, 4
      %s947 = smul.addr %s946, 8
      %s948 = scalar_lea.vmem [#allocation4], %s947
      %v949 = vld [vmem:[%s948] sm:$0xff]
      %v950 = vld [vmem:[%s948 + $0x8] sm:$0xff]
      %v951 = vld [vmem:[%s948 + $0x10] sm:$0xff]
      %v952 = vld [vmem:[%s948 + $0x18] sm:$0xff]
      %v953 = vpack.c.bf16 %v944, %v944
      %954 = vmatpush.bf16.msra.mxu0 %v790
      %955 = vmatpush.bf16.msra.mxu0 %v786
      %956 = vmatpush.bf16.msra.mxu0 %v782
      %957 = vmatpush.bf16.msra.mxu0 %v778
      %958 = vmatpush.bf16.msra.mxu0 %v774
      %959 = vmatpush.bf16.msra.mxu0 %v770
      %960 = vmatpush.bf16.msra.mxu0 %v766
      %961 = vmatpush.bf16.msra.mxu0 %v762
      %962 = vmatmul.bf16.gmra.mxu0 %v953
      %v963 = vpop.f32.mrf.mxu0
      %v964 = vadd.f32 0.0, %v963
      %v965 = vpop.f32.mrf.mxu0
      %966 = vdwg.mxu0
      %967 = vmatpush.bf16.msra.mxu0 %v791
      %968 = vmatpush.bf16.msra.mxu0 %v787
      %969 = vmatpush.bf16.msra.mxu0 %v783
      %970 = vmatpush.bf16.msra.mxu0 %v779
      %971 = vmatpush.bf16.msra.mxu0 %v775
      %972 = vmatpush.bf16.msra.mxu0 %v771
      %973 = vmatpush.bf16.msra.mxu0 %v767
      %974 = vmatpush.bf16.msra.mxu0 %v763
      %975 = vmatmul.bf16.gmra.mxu0 %v953
      %v976 = vpop.f32.mrf.mxu0
      %v977 = vadd.f32 0.0, %v976
      %v978 = vpop.f32.mrf.mxu0
      %979 = vdwg.mxu0
      %980 = vmatpush.bf16.msra.mxu0 %v792
      %981 = vmatpush.bf16.msra.mxu0 %v788
      %982 = vmatpush.bf16.msra.mxu0 %v784
      %983 = vmatpush.bf16.msra.mxu0 %v780
      %984 = vmatpush.bf16.msra.mxu0 %v776
      %985 = vmatpush.bf16.msra.mxu0 %v772
      %986 = vmatpush.bf16.msra.mxu0 %v768
      %987 = vmatpush.bf16.msra.mxu0 %v764
      %988 = vmatmul.bf16.gmra.mxu0 %v953
      %v989 = vpop.f32.mrf.mxu0
      %v990 = vadd.f32 0.0, %v989
      %v991 = vpop.f32.mrf.mxu0
      %992 = vdwg.mxu0
      %993 = vmatpush.bf16.msra.mxu0 %v793
      %994 = vmatpush.bf16.msra.mxu0 %v789
      %995 = vmatpush.bf16.msra.mxu0 %v785
      %996 = vmatpush.bf16.msra.mxu0 %v781
      %997 = vmatpush.bf16.msra.mxu0 %v777
      %998 = vmatpush.bf16.msra.mxu0 %v773
      %999 = vmatpush.bf16.msra.mxu0 %v769
      %1000 = vmatpush.bf16.msra.mxu0 %v765
      %1001 = vmatmul.bf16.gmra.mxu0 %v953
      %v1002 = vpop.f32.mrf.mxu0
      %v1003 = vadd.f32 0.0, %v1002
      %v1004 = vpop.f32.mrf.mxu0
      %1005 = vdwg.mxu0
      %v1006 = vadd.f32 %v949, %v964
      %v1007 = vadd.f32 %v950, %v977
      %v1008 = vadd.f32 %v951, %v990
      %v1009 = vadd.f32 %v952, %v1003
      %v1010 = vxor.u32 %v1006, 2147483648
      %v1011 = vmul.f32 %v1010, 1.442695
      %v1012 = vpow.pop %v1011
      %v1013 = vadd.f32 %v1012, 1.0
      %v1014 = vrcp.pop %v1013
      %v1015 = vmul.f32 %v1013, %v1014
      %v1016 = vsub.f32 1.0, %v1015
      %v1017 = vmul.f32 %v1014, %v1016
      %v1018 = vadd.f32 %v1014, %v1017
      %vm1019 = vweird.f32 %v1013
      %vm1020 = vweird.f32 %v1014
      %vm1021 = vmor %vm1019, %vm1020
      %v1022 = vsel %vm1021, %v1014, %v1018
      %v1023 = vand.u32 2147483647, %v1013
      %vm1024 = vcmp.eq.f32.partialorder %v1023, 8.507059e+37
      %v1025 = vand.u32 %v1013, 2147483648
      %v1026 = vor.u32 1.1754944e-38, %v1025
      %v1027 = vsel %vm1024, %v1026, %v1022
      %v1028 = vmul.f32 1.0, %v1027
      %v1029 = vxor.u32 %v1007, 2147483648
      %v1030 = vmul.f32 %v1029, 1.442695
      %v1031 = vpow.pop %v1030
      %v1032 = vadd.f32 %v1031, 1.0
      %v1033 = vrcp.pop %v1032
      %v1034 = vmul.f32 %v1032, %v1033
      %v1035 = vsub.f32 1.0, %v1034
      %v1036 = vmul.f32 %v1033, %v1035
      %v1037 = vadd.f32 %v1033, %v1036
      %vm1038 = vweird.f32 %v1032
      %vm1039 = vweird.f32 %v1033
      %vm1040 = vmor %vm1038, %vm1039
      %v1041 = vsel %vm1040, %v1033, %v1037
      %v1042 = vand.u32 2147483647, %v1032
      %vm1043 = vcmp.eq.f32.partialorder %v1042, 8.507059e+37
      %v1044 = vand.u32 %v1032, 2147483648
      %v1045 = vor.u32 1.1754944e-38, %v1044
      %v1046 = vsel %vm1043, %v1045, %v1041
      %v1047 = vmul.f32 1.0, %v1046
      %v1048 = vtanh.pop %v1008
      %v1049 = vxor.u32 %v1009, 2147483648
      %v1050 = vmul.f32 %v1049, 1.442695
      %v1051 = vpow.pop %v1050
      %v1052 = vadd.f32 %v1051, 1.0
      %v1053 = vrcp.pop %v1052
      %v1054 = vmul.f32 %v1052, %v1053
      %v1055 = vsub.f32 1.0, %v1054
      %v1056 = vmul.f32 %v1053, %v1055
      %v1057 = vadd.f32 %v1053, %v1056
      %vm1058 = vweird.f32 %v1052
      %vm1059 = vweird.f32 %v1053
      %vm1060 = vmor %vm1058, %vm1059
      %v1061 = vsel %vm1060, %v1053, %v1057
      %v1062 = vand.u32 2147483647, %v1052
      %vm1063 = vcmp.eq.f32.partialorder %v1062, 8.507059e+37
      %v1064 = vand.u32 %v1052, 2147483648
      %v1065 = vor.u32 1.1754944e-38, %v1064
      %v1066 = vsel %vm1063, %v1065, %v1061
      %v1067 = vmul.f32 1.0, %v1066
      %v1068 = vmul.f32 %v1047, %v942
      %v1069 = vmul.f32 %v1028, %v1048
      %v1070 = vadd.f32 %v1068, %v1069
      %v1071 = vtanh.pop %v1070
      %v1072 = vmul.f32 %v1067, %v1071
      %s1073 = scalar_lea.vmem %s265, 8
      %1074 = vst [vmem:[%s1073] sm:$0xff] %v1072
      %s1075 = smul.u32 2, 4
      %s1076 = smul.addr %s1075, 8
      %s1077 = scalar_lea.vmem [#allocation4], %s1076
      %v1078 = vld [vmem:[%s1077] sm:$0xff]
      %v1079 = vld [vmem:[%s1077 + $0x8] sm:$0xff]
      %v1080 = vld [vmem:[%s1077 + $0x10] sm:$0xff]
      %v1081 = vld [vmem:[%s1077 + $0x18] sm:$0xff]
      %v1082 = vpack.c.bf16 %v1072, %v1072
      %1083 = vmatpush.bf16.msra.mxu0 %v790
      %1084 = vmatpush.bf16.msra.mxu0 %v786
      %1085 = vmatpush.bf16.msra.mxu0 %v782
      %1086 = vmatpush.bf16.msra.mxu0 %v778
      %1087 = vmatpush.bf16.msra.mxu0 %v774
      %1088 = vmatpush.bf16.msra.mxu0 %v770
      %1089 = vmatpush.bf16.msra.mxu0 %v766
      %1090 = vmatpush.bf16.msra.mxu0 %v762
      %1091 = vmatmul.bf16.gmra.mxu0 %v1082
      %v1092 = vpop.f32.mrf.mxu0
      %v1093 = vadd.f32 0.0, %v1092
      %v1094 = vpop.f32.mrf.mxu0
      %1095 = vdwg.mxu0
      %1096 = vmatpush.bf16.msra.mxu0 %v791
      %1097 = vmatpush.bf16.msra.mxu0 %v787
      %1098 = vmatpush.bf16.msra.mxu0 %v783
      %1099 = vmatpush.bf16.msra.mxu0 %v779
      %1100 = vmatpush.bf16.msra.mxu0 %v775
      %1101 = vmatpush.bf16.msra.mxu0 %v771
      %1102 = vmatpush.bf16.msra.mxu0 %v767
      %1103 = vmatpush.bf16.msra.mxu0 %v763
      %1104 = vmatmul.bf16.gmra.mxu0 %v1082
      %v1105 = vpop.f32.mrf.mxu0
      %v1106 = vadd.f32 0.0, %v1105
      %v1107 = vpop.f32.mrf.mxu0
      %1108 = vdwg.mxu0
      %1109 = vmatpush.bf16.msra.mxu0 %v792
      %1110 = vmatpush.bf16.msra.mxu0 %v788
      %1111 = vmatpush.bf16.msra.mxu0 %v784
      %1112 = vmatpush.bf16.msra.mxu0 %v780
      %1113 = vmatpush.bf16.msra.mxu0 %v776
      %1114 = vmatpush.bf16.msra.mxu0 %v772
      %1115 = vmatpush.bf16.msra.mxu0 %v768
      %1116 = vmatpush.bf16.msra.mxu0 %v764
      %1117 = vmatmul.bf16.gmra.mxu0 %v1082
      %v1118 = vpop.f32.mrf.mxu0
      %v1119 = vadd.f32 0.0, %v1118
      %v1120 = vpop.f32.mrf.mxu0
      %1121 = vdwg.mxu0
      %1122 = vmatpush.bf16.msra.mxu0 %v793
      %1123 = vmatpush.bf16.msra.mxu0 %v789
      %1124 = vmatpush.bf16.msra.mxu0 %v785
      %1125 = vmatpush.bf16.msra.mxu0 %v781
      %1126 = vmatpush.bf16.msra.mxu0 %v777
      %1127 = vmatpush.bf16.msra.mxu0 %v773
      %1128 = vmatpush.bf16.msra.mxu0 %v769
      %1129 = vmatpush.bf16.msra.mxu0 %v765
      %1130 = vmatmul.bf16.gmra.mxu0 %v1082
      %v1131 = vpop.f32.mrf.mxu0
      %v1132 = vadd.f32 0.0, %v1131
      %v1133 = vpop.f32.mrf.mxu0
      %1134 = vdwg.mxu0
      %v1135 = vadd.f32 %v1078, %v1093
      %v1136 = vadd.f32 %v1079, %v1106
      %v1137 = vadd.f32 %v1080, %v1119
      %v1138 = vadd.f32 %v1081, %v1132
      %v1139 = vxor.u32 %v1135, 2147483648
      %v1140 = vmul.f32 %v1139, 1.442695
      %v1141 = vpow.pop %v1140
      %v1142 = vadd.f32 %v1141, 1.0
      %v1143 = vrcp.pop %v1142
      %v1144 = vmul.f32 %v1142, %v1143
      %v1145 = vsub.f32 1.0, %v1144
      %v1146 = vmul.f32 %v1143, %v1145
      %v1147 = vadd.f32 %v1143, %v1146
      %vm1148 = vweird.f32 %v1142
      %vm1149 = vweird.f32 %v1143
      %vm1150 = vmor %vm1148, %vm1149
      %v1151 = vsel %vm1150, %v1143, %v1147
      %v1152 = vand.u32 2147483647, %v1142
      %vm1153 = vcmp.eq.f32.partialorder %v1152, 8.507059e+37
      %v1154 = vand.u32 %v1142, 2147483648
      %v1155 = vor.u32 1.1754944e-38, %v1154
      %v1156 = vsel %vm1153, %v1155, %v1151
      %v1157 = vmul.f32 1.0, %v1156
      %v1158 = vxor.u32 %v1136, 2147483648
      %v1159 = vmul.f32 %v1158, 1.442695
      %v1160 = vpow.pop %v1159
      %v1161 = vadd.f32 %v1160, 1.0
      %v1162 = vrcp.pop %v1161
      %v1163 = vmul.f32 %v1161, %v1162
      %v1164 = vsub.f32 1.0, %v1163
      %v1165 = vmul.f32 %v1162, %v1164
      %v1166 = vadd.f32 %v1162, %v1165
      %vm1167 = vweird.f32 %v1161
      %vm1168 = vweird.f32 %v1162
      %vm1169 = vmor %vm1167, %vm1168
      %v1170 = vsel %vm1169, %v1162, %v1166
      %v1171 = vand.u32 2147483647, %v1161
      %vm1172 = vcmp.eq.f32.partialorder %v1171, 8.507059e+37
      %v1173 = vand.u32 %v1161, 2147483648
      %v1174 = vor.u32 1.1754944e-38, %v1173
      %v1175 = vsel %vm1172, %v1174, %v1170
      %v1176 = vmul.f32 1.0, %v1175
      %v1177 = vtanh.pop %v1137
      %v1178 = vxor.u32 %v1138, 2147483648
      %v1179 = vmul.f32 %v1178, 1.442695
      %v1180 = vpow.pop %v1179
      %v1181 = vadd.f32 %v1180, 1.0
      %v1182 = vrcp.pop %v1181
      %v1183 = vmul.f32 %v1181, %v1182
      %v1184 = vsub.f32 1.0, %v1183
      %v1185 = vmul.f32 %v1182, %v1184
      %v1186 = vadd.f32 %v1182, %v1185
      %vm1187 = vweird.f32 %v1181
      %vm1188 = vweird.f32 %v1182
      %vm1189 = vmor %vm1187, %vm1188
      %v1190 = vsel %vm1189, %v1182, %v1186
      %v1191 = vand.u32 2147483647, %v1181
      %vm1192 = vcmp.eq.f32.partialorder %v1191, 8.507059e+37
      %v1193 = vand.u32 %v1181, 2147483648
      %v1194 = vor.u32 1.1754944e-38, %v1193
      %v1195 = vsel %vm1192, %v1194, %v1190
      %v1196 = vmul.f32 1.0, %v1195
      %v1197 = vmul.f32 %v1176, %v1070
      %v1198 = vmul.f32 %v1157, %v1177
      %v1199 = vadd.f32 %v1197, %v1198
      %v1200 = vtanh.pop %v1199
      %v1201 = vmul.f32 %v1196, %v1200
      %s1202 = scalar_lea.vmem %s265, 16
      %1203 = vst [vmem:[%s1202] sm:$0xff] %v1201
      %s1204 = smul.u32 3, 4
      %s1205 = smul.addr %s1204, 8
      %s1206 = scalar_lea.vmem [#allocation4], %s1205
      %v1207 = vld [vmem:[%s1206] sm:$0xff]
      %v1208 = vld [vmem:[%s1206 + $0x8] sm:$0xff]
      %v1209 = vld [vmem:[%s1206 + $0x10] sm:$0xff]
      %v1210 = vld [vmem:[%s1206 + $0x18] sm:$0xff]
      %v1211 = vpack.c.bf16 %v1201, %v1201
      %1212 = vmatpush.bf16.msra.mxu0 %v790
      %1213 = vmatpush.bf16.msra.mxu0 %v786
      %1214 = vmatpush.bf16.msra.mxu0 %v782
      %1215 = vmatpush.bf16.msra.mxu0 %v778
      %1216 = vmatpush.bf16.msra.mxu0 %v774
      %1217 = vmatpush.bf16.msra.mxu0 %v770
      %1218 = vmatpush.bf16.msra.mxu0 %v766
      %1219 = vmatpush.bf16.msra.mxu0 %v762
      %1220 = vmatmul.bf16.gmra.mxu0 %v1211
      %v1221 = vpop.f32.mrf.mxu0
      %v1222 = vadd.f32 0.0, %v1221
      %v1223 = vpop.f32.mrf.mxu0
      %1224 = vdwg.mxu0
      %1225 = vmatpush.bf16.msra.mxu0 %v791
      %1226 = vmatpush.bf16.msra.mxu0 %v787
      %1227 = vmatpush.bf16.msra.mxu0 %v783
      %1228 = vmatpush.bf16.msra.mxu0 %v779
      %1229 = vmatpush.bf16.msra.mxu0 %v775
      %1230 = vmatpush.bf16.msra.mxu0 %v771
      %1231 = vmatpush.bf16.msra.mxu0 %v767
      %1232 = vmatpush.bf16.msra.mxu0 %v763
      %1233 = vmatmul.bf16.gmra.mxu0 %v1211
      %v1234 = vpop.f32.mrf.mxu0
      %v1235 = vadd.f32 0.0, %v1234
      %v1236 = vpop.f32.mrf.mxu0
      %1237 = vdwg.mxu0
      %1238 = vmatpush.bf16.msra.mxu0 %v792
      %1239 = vmatpush.bf16.msra.mxu0 %v788
      %1240 = vmatpush.bf16.msra.mxu0 %v784
      %1241 = vmatpush.bf16.msra.mxu0 %v780
      %1242 = vmatpush.bf16.msra.mxu0 %v776
      %1243 = vmatpush.bf16.msra.mxu0 %v772
      %1244 = vmatpush.bf16.msra.mxu0 %v768
      %1245 = vmatpush.bf16.msra.mxu0 %v764
      %1246 = vmatmul.bf16.gmra.mxu0 %v1211
      %v1247 = vpop.f32.mrf.mxu0
      %v1248 = vadd.f32 0.0, %v1247
      %v1249 = vpop.f32.mrf.mxu0
      %1250 = vdwg.mxu0
      %1251 = vmatpush.bf16.msra.mxu0 %v793
      %1252 = vmatpush.bf16.msra.mxu0 %v789
      %1253 = vmatpush.bf16.msra.mxu0 %v785
      %1254 = vmatpush.bf16.msra.mxu0 %v781
      %1255 = vmatpush.bf16.msra.mxu0 %v777
      %1256 = vmatpush.bf16.msra.mxu0 %v773
      %1257 = vmatpush.bf16.msra.mxu0 %v769
      %1258 = vmatpush.bf16.msra.mxu0 %v765
      %1259 = vmatmul.bf16.gmra.mxu0 %v1211
      %v1260 = vpop.f32.mrf.mxu0
      %v1261 = vadd.f32 0.0, %v1260
      %v1262 = vpop.f32.mrf.mxu0
      %1263 = vdwg.mxu0
      %v1264 = vadd.f32 %v1207, %v1222
      %v1265 = vadd.f32 %v1208, %v1235
      %v1266 = vadd.f32 %v1209, %v1248
      %v1267 = vadd.f32 %v1210, %v1261
      %v1268 = vxor.u32 %v1264, 2147483648
      %v1269 = vmul.f32 %v1268, 1.442695
      %v1270 = vpow.pop %v1269
      %v1271 = vadd.f32 %v1270, 1.0
      %v1272 = vrcp.pop %v1271
      %v1273 = vmul.f32 %v1271, %v1272
      %v1274 = vsub.f32 1.0, %v1273
      %v1275 = vmul.f32 %v1272, %v1274
      %v1276 = vadd.f32 %v1272, %v1275
      %vm1277 = vweird.f32 %v1271
      %vm1278 = vweird.f32 %v1272
      %vm1279 = vmor %vm1277, %vm1278
      %v1280 = vsel %vm1279, %v1272, %v1276
      %v1281 = vand.u32 2147483647, %v1271
      %vm1282 = vcmp.eq.f32.partialorder %v1281, 8.507059e+37
      %v1283 = vand.u32 %v1271, 2147483648
      %v1284 = vor.u32 1.1754944e-38, %v1283
      %v1285 = vsel %vm1282, %v1284, %v1280
      %v1286 = vmul.f32 1.0, %v1285
      %v1287 = vxor.u32 %v1265, 2147483648
      %v1288 = vmul.f32 %v1287, 1.442695
      %v1289 = vpow.pop %v1288
      %v1290 = vadd.f32 %v1289, 1.0
      %v1291 = vrcp.pop %v1290
      %v1292 = vmul.f32 %v1290, %v1291
      %v1293 = vsub.f32 1.0, %v1292
      %v1294 = vmul.f32 %v1291, %v1293
      %v1295 = vadd.f32 %v1291, %v1294
      %vm1296 = vweird.f32 %v1290
      %vm1297 = vweird.f32 %v1291
      %vm1298 = vmor %vm1296, %vm1297
      %v1299 = vsel %vm1298, %v1291, %v1295
      %v1300 = vand.u32 2147483647, %v1290
      %vm1301 = vcmp.eq.f32.partialorder %v1300, 8.507059e+37
      %v1302 = vand.u32 %v1290, 2147483648
      %v1303 = vor.u32 1.1754944e-38, %v1302
      %v1304 = vsel %vm1301, %v1303, %v1299
      %v1305 = vmul.f32 1.0, %v1304
      %v1306 = vtanh.pop %v1266
      %v1307 = vxor.u32 %v1267, 2147483648
      %v1308 = vmul.f32 %v1307, 1.442695
      %v1309 = vpow.pop %v1308
      %v1310 = vadd.f32 %v1309, 1.0
      %v1311 = vrcp.pop %v1310
      %v1312 = vmul.f32 %v1310, %v1311
      %v1313 = vsub.f32 1.0, %v1312
      %v1314 = vmul.f32 %v1311, %v1313
      %v1315 = vadd.f32 %v1311, %v1314
      %vm1316 = vweird.f32 %v1310
      %vm1317 = vweird.f32 %v1311
      %vm1318 = vmor %vm1316, %vm1317
      %v1319 = vsel %vm1318, %v1311, %v1315
      %v1320 = vand.u32 2147483647, %v1310
      %vm1321 = vcmp.eq.f32.partialorder %v1320, 8.507059e+37
      %v1322 = vand.u32 %v1310, 2147483648
      %v1323 = vor.u32 1.1754944e-38, %v1322
      %v1324 = vsel %vm1321, %v1323, %v1319
      %v1325 = vmul.f32 1.0, %v1324
      %v1326 = vmul.f32 %v1305, %v1199
      %v1327 = vmul.f32 %v1286, %v1306
      %v1328 = vadd.f32 %v1326, %v1327
      %v1329 = vtanh.pop %v1328
      %v1330 = vmul.f32 %v1325, %v1329
      %s1331 = scalar_lea.vmem %s265, 24
      %1332 = vst [vmem:[%s1331] sm:$0xff] %v1330
      %s1333 = smul.u32 4, 4
      %s1334 = smul.addr %s1333, 8
      %s1335 = scalar_lea.vmem [#allocation4], %s1334
      %v1336 = vld [vmem:[%s1335] sm:$0xff]
      %v1337 = vld [vmem:[%s1335 + $0x8] sm:$0xff]
      %v1338 = vld [vmem:[%s1335 + $0x10] sm:$0xff]
      %v1339 = vld [vmem:[%s1335 + $0x18] sm:$0xff]
      %v1340 = vpack.c.bf16 %v1330, %v1330
      %1341 = vmatpush.bf16.msra.mxu0 %v790
      %1342 = vmatpush.bf16.msra.mxu0 %v786
      %1343 = vmatpush.bf16.msra.mxu0 %v782
      %1344 = vmatpush.bf16.msra.mxu0 %v778
      %1345 = vmatpush.bf16.msra.mxu0 %v774
      %1346 = vmatpush.bf16.msra.mxu0 %v770
      %1347 = vmatpush.bf16.msra.mxu0 %v766
      %1348 = vmatpush.bf16.msra.mxu0 %v762
      %1349 = vmatmul.bf16.gmra.mxu0 %v1340
      %v1350 = vpop.f32.mrf.mxu0
      %v1351 = vadd.f32 0.0, %v1350
      %v1352 = vpop.f32.mrf.mxu0
      %1353 = vdwg.mxu0
      %1354 = vmatpush.bf16.msra.mxu0 %v791
      %1355 = vmatpush.bf16.msra.mxu0 %v787
      %1356 = vmatpush.bf16.msra.mxu0 %v783
      %1357 = vmatpush.bf16.msra.mxu0 %v779
      %1358 = vmatpush.bf16.msra.mxu0 %v775
      %1359 = vmatpush.bf16.msra.mxu0 %v771
      %1360 = vmatpush.bf16.msra.mxu0 %v767
      %1361 = vmatpush.bf16.msra.mxu0 %v763
      %1362 = vmatmul.bf16.gmra.mxu0 %v1340
      %v1363 = vpop.f32.mrf.mxu0
      %v1364 = vadd.f32 0.0, %v1363
      %v1365 = vpop.f32.mrf.mxu0
      %1366 = vdwg.mxu0
      %1367 = vmatpush.bf16.msra.mxu0 %v792
      %1368 = vmatpush.bf16.msra.mxu0 %v788
      %1369 = vmatpush.bf16.msra.mxu0 %v784
      %1370 = vmatpush.bf16.msra.mxu0 %v780
      %1371 = vmatpush.bf16.msra.mxu0 %v776
      %1372 = vmatpush.bf16.msra.mxu0 %v772
      %1373 = vmatpush.bf16.msra.mxu0 %v768
      %1374 = vmatpush.bf16.msra.mxu0 %v764
      %1375 = vmatmul.bf16.gmra.mxu0 %v1340
      %v1376 = vpop.f32.mrf.mxu0
      %v1377 = vadd.f32 0.0, %v1376
      %v1378 = vpop.f32.mrf.mxu0
      %1379 = vdwg.mxu0
      %1380 = vmatpush.bf16.msra.mxu0 %v793
      %1381 = vmatpush.bf16.msra.mxu0 %v789
      %1382 = vmatpush.bf16.msra.mxu0 %v785
      %1383 = vmatpush.bf16.msra.mxu0 %v781
      %1384 = vmatpush.bf16.msra.mxu0 %v777
      %1385 = vmatpush.bf16.msra.mxu0 %v773
      %1386 = vmatpush.bf16.msra.mxu0 %v769
      %1387 = vmatpush.bf16.msra.mxu0 %v765
      %1388 = vmatmul.bf16.gmra.mxu0 %v1340
      %v1389 = vpop.f32.mrf.mxu0
      %v1390 = vadd.f32 0.0, %v1389
      %v1391 = vpop.f32.mrf.mxu0
      %1392 = vdwg.mxu0
      %v1393 = vadd.f32 %v1336, %v1351
      %v1394 = vadd.f32 %v1337, %v1364
      %v1395 = vadd.f32 %v1338, %v1377
      %v1396 = vadd.f32 %v1339, %v1390
      %v1397 = vxor.u32 %v1393, 2147483648
      %v1398 = vmul.f32 %v1397, 1.442695
      %v1399 = vpow.pop %v1398
      %v1400 = vadd.f32 %v1399, 1.0
      %v1401 = vrcp.pop %v1400
      %v1402 = vmul.f32 %v1400, %v1401
      %v1403 = vsub.f32 1.0, %v1402
      %v1404 = vmul.f32 %v1401, %v1403
      %v1405 = vadd.f32 %v1401, %v1404
      %vm1406 = vweird.f32 %v1400
      %vm1407 = vweird.f32 %v1401
      %vm1408 = vmor %vm1406, %vm1407
      %v1409 = vsel %vm1408, %v1401, %v1405
      %v1410 = vand.u32 2147483647, %v1400
      %vm1411 = vcmp.eq.f32.partialorder %v1410, 8.507059e+37
      %v1412 = vand.u32 %v1400, 2147483648
      %v1413 = vor.u32 1.1754944e-38, %v1412
      %v1414 = vsel %vm1411, %v1413, %v1409
      %v1415 = vmul.f32 1.0, %v1414
      %v1416 = vxor.u32 %v1394, 2147483648
      %v1417 = vmul.f32 %v1416, 1.442695
      %v1418 = vpow.pop %v1417
      %v1419 = vadd.f32 %v1418, 1.0
      %v1420 = vrcp.pop %v1419
      %v1421 = vmul.f32 %v1419, %v1420
      %v1422 = vsub.f32 1.0, %v1421
      %v1423 = vmul.f32 %v1420, %v1422
      %v1424 = vadd.f32 %v1420, %v1423
      %vm1425 = vweird.f32 %v1419
      %vm1426 = vweird.f32 %v1420
      %vm1427 = vmor %vm1425, %vm1426
      %v1428 = vsel %vm1427, %v1420, %v1424
      %v1429 = vand.u32 2147483647, %v1419
      %vm1430 = vcmp.eq.f32.partialorder %v1429, 8.507059e+37
      %v1431 = vand.u32 %v1419, 2147483648
      %v1432 = vor.u32 1.1754944e-38, %v1431
      %v1433 = vsel %vm1430, %v1432, %v1428
      %v1434 = vmul.f32 1.0, %v1433
      %v1435 = vtanh.pop %v1395
      %v1436 = vxor.u32 %v1396, 2147483648
      %v1437 = vmul.f32 %v1436, 1.442695
      %v1438 = vpow.pop %v1437
      %v1439 = vadd.f32 %v1438, 1.0
      %v1440 = vrcp.pop %v1439
      %v1441 = vmul.f32 %v1439, %v1440
      %v1442 = vsub.f32 1.0, %v1441
      %v1443 = vmul.f32 %v1440, %v1442
      %v1444 = vadd.f32 %v1440, %v1443
      %vm1445 = vweird.f32 %v1439
      %vm1446 = vweird.f32 %v1440
      %vm1447 = vmor %vm1445, %vm1446
      %v1448 = vsel %vm1447, %v1440, %v1444
      %v1449 = vand.u32 2147483647, %v1439
      %vm1450 = vcmp.eq.f32.partialorder %v1449, 8.507059e+37
      %v1451 = vand.u32 %v1439, 2147483648
      %v1452 = vor.u32 1.1754944e-38, %v1451
      %v1453 = vsel %vm1450, %v1452, %v1448
      %v1454 = vmul.f32 1.0, %v1453
      %v1455 = vmul.f32 %v1434, %v1328
      %v1456 = vmul.f32 %v1415, %v1435
      %v1457 = vadd.f32 %v1455, %v1456
      %v1458 = vtanh.pop %v1457
      %v1459 = vmul.f32 %v1454, %v1458
      %s1460 = scalar_lea.vmem %s265, 32
      %1461 = vst [vmem:[%s1460] sm:$0xff] %v1459
      %s1462 = smul.u32 5, 4
      %s1463 = smul.addr %s1462, 8
      %s1464 = scalar_lea.vmem [#allocation4], %s1463
      %v1465 = vld [vmem:[%s1464] sm:$0xff]
      %v1466 = vld [vmem:[%s1464 + $0x8] sm:$0xff]
      %v1467 = vld [vmem:[%s1464 + $0x10] sm:$0xff]
      %v1468 = vld [vmem:[%s1464 + $0x18] sm:$0xff]
      %v1469 = vpack.c.bf16 %v1459, %v1459
      %1470 = vmatpush.bf16.msra.mxu0 %v790
      %1471 = vmatpush.bf16.msra.mxu0 %v786
      %1472 = vmatpush.bf16.msra.mxu0 %v782
      %1473 = vmatpush.bf16.msra.mxu0 %v778
      %1474 = vmatpush.bf16.msra.mxu0 %v774
      %1475 = vmatpush.bf16.msra.mxu0 %v770
      %1476 = vmatpush.bf16.msra.mxu0 %v766
      %1477 = vmatpush.bf16.msra.mxu0 %v762
      %1478 = vmatmul.bf16.gmra.mxu0 %v1469
      %v1479 = vpop.f32.mrf.mxu0
      %v1480 = vadd.f32 0.0, %v1479
      %v1481 = vpop.f32.mrf.mxu0
      %1482 = vdwg.mxu0
      %1483 = vmatpush.bf16.msra.mxu0 %v791
      %1484 = vmatpush.bf16.msra.mxu0 %v787
      %1485 = vmatpush.bf16.msra.mxu0 %v783
      %1486 = vmatpush.bf16.msra.mxu0 %v779
      %1487 = vmatpush.bf16.msra.mxu0 %v775
      %1488 = vmatpush.bf16.msra.mxu0 %v771
      %1489 = vmatpush.bf16.msra.mxu0 %v767
      %1490 = vmatpush.bf16.msra.mxu0 %v763
      %1491 = vmatmul.bf16.gmra.mxu0 %v1469
      %v1492 = vpop.f32.mrf.mxu0
      %v1493 = vadd.f32 0.0, %v1492
      %v1494 = vpop.f32.mrf.mxu0
      %1495 = vdwg.mxu0
      %1496 = vmatpush.bf16.msra.mxu0 %v792
      %1497 = vmatpush.bf16.msra.mxu0 %v788
      %1498 = vmatpush.bf16.msra.mxu0 %v784
      %1499 = vmatpush.bf16.msra.mxu0 %v780
      %1500 = vmatpush.bf16.msra.mxu0 %v776
      %1501 = vmatpush.bf16.msra.mxu0 %v772
      %1502 = vmatpush.bf16.msra.mxu0 %v768
      %1503 = vmatpush.bf16.msra.mxu0 %v764
      %1504 = vmatmul.bf16.gmra.mxu0 %v1469
      %v1505 = vpop.f32.mrf.mxu0
      %v1506 = vadd.f32 0.0, %v1505
      %v1507 = vpop.f32.mrf.mxu0
      %1508 = vdwg.mxu0
      %1509 = vmatpush.bf16.msra.mxu0 %v793
      %1510 = vmatpush.bf16.msra.mxu0 %v789
      %1511 = vmatpush.bf16.msra.mxu0 %v785
      %1512 = vmatpush.bf16.msra.mxu0 %v781
      %1513 = vmatpush.bf16.msra.mxu0 %v777
      %1514 = vmatpush.bf16.msra.mxu0 %v773
      %1515 = vmatpush.bf16.msra.mxu0 %v769
      %1516 = vmatpush.bf16.msra.mxu0 %v765
      %1517 = vmatmul.bf16.gmra.mxu0 %v1469
      %v1518 = vpop.f32.mrf.mxu0
      %v1519 = vadd.f32 0.0, %v1518
      %v1520 = vpop.f32.mrf.mxu0
      %1521 = vdwg.mxu0
      %v1522 = vadd.f32 %v1465, %v1480
      %v1523 = vadd.f32 %v1466, %v1493
      %v1524 = vadd.f32 %v1467, %v1506
      %v1525 = vadd.f32 %v1468, %v1519
      %v1526 = vxor.u32 %v1522, 2147483648
      %v1527 = vmul.f32 %v1526, 1.442695
      %v1528 = vpow.pop %v1527
      %v1529 = vadd.f32 %v1528, 1.0
      %v1530 = vrcp.pop %v1529
      %v1531 = vmul.f32 %v1529, %v1530
      %v1532 = vsub.f32 1.0, %v1531
      %v1533 = vmul.f32 %v1530, %v1532
      %v1534 = vadd.f32 %v1530, %v1533
      %vm1535 = vweird.f32 %v1529
      %vm1536 = vweird.f32 %v1530
      %vm1537 = vmor %vm1535, %vm1536
      %v1538 = vsel %vm1537, %v1530, %v1534
      %v1539 = vand.u32 2147483647, %v1529
      %vm1540 = vcmp.eq.f32.partialorder %v1539, 8.507059e+37
      %v1541 = vand.u32 %v1529, 2147483648
      %v1542 = vor.u32 1.1754944e-38, %v1541
      %v1543 = vsel %vm1540, %v1542, %v1538
      %v1544 = vmul.f32 1.0, %v1543
      %v1545 = vxor.u32 %v1523, 2147483648
      %v1546 = vmul.f32 %v1545, 1.442695
      %v1547 = vpow.pop %v1546
      %v1548 = vadd.f32 %v1547, 1.0
      %v1549 = vrcp.pop %v1548
      %v1550 = vmul.f32 %v1548, %v1549
      %v1551 = vsub.f32 1.0, %v1550
      %v1552 = vmul.f32 %v1549, %v1551
      %v1553 = vadd.f32 %v1549, %v1552
      %vm1554 = vweird.f32 %v1548
      %vm1555 = vweird.f32 %v1549
      %vm1556 = vmor %vm1554, %vm1555
      %v1557 = vsel %vm1556, %v1549, %v1553
      %v1558 = vand.u32 2147483647, %v1548
      %vm1559 = vcmp.eq.f32.partialorder %v1558, 8.507059e+37
      %v1560 = vand.u32 %v1548, 2147483648
      %v1561 = vor.u32 1.1754944e-38, %v1560
      %v1562 = vsel %vm1559, %v1561, %v1557
      %v1563 = vmul.f32 1.0, %v1562
      %v1564 = vtanh.pop %v1524
      %v1565 = vxor.u32 %v1525, 2147483648
      %v1566 = vmul.f32 %v1565, 1.442695
      %v1567 = vpow.pop %v1566
      %v1568 = vadd.f32 %v1567, 1.0
      %v1569 = vrcp.pop %v1568
      %v1570 = vmul.f32 %v1568, %v1569
      %v1571 = vsub.f32 1.0, %v1570
      %v1572 = vmul.f32 %v1569, %v1571
      %v1573 = vadd.f32 %v1569, %v1572
      %vm1574 = vweird.f32 %v1568
      %vm1575 = vweird.f32 %v1569
      %vm1576 = vmor %vm1574, %vm1575
      %v1577 = vsel %vm1576, %v1569, %v1573
      %v1578 = vand.u32 2147483647, %v1568
      %vm1579 = vcmp.eq.f32.partialorder %v1578, 8.507059e+37
      %v1580 = vand.u32 %v1568, 2147483648
      %v1581 = vor.u32 1.1754944e-38, %v1580
      %v1582 = vsel %vm1579, %v1581, %v1577
      %v1583 = vmul.f32 1.0, %v1582
      %v1584 = vmul.f32 %v1563, %v1457
      %v1585 = vmul.f32 %v1544, %v1564
      %v1586 = vadd.f32 %v1584, %v1585
      %v1587 = vtanh.pop %v1586
      %v1588 = vmul.f32 %v1583, %v1587
      %s1589 = scalar_lea.vmem %s265, 40
      %1590 = vst [vmem:[%s1589] sm:$0xff] %v1588
      %s1591 = smul.u32 6, 4
      %s1592 = smul.addr %s1591, 8
      %s1593 = scalar_lea.vmem [#allocation4], %s1592
      %v1594 = vld [vmem:[%s1593] sm:$0xff]
      %v1595 = vld [vmem:[%s1593 + $0x8] sm:$0xff]
      %v1596 = vld [vmem:[%s1593 + $0x10] sm:$0xff]
      %v1597 = vld [vmem:[%s1593 + $0x18] sm:$0xff]
      %v1598 = vpack.c.bf16 %v1588, %v1588
      %1599 = vmatpush.bf16.msra.mxu0 %v790
      %1600 = vmatpush.bf16.msra.mxu0 %v786
      %1601 = vmatpush.bf16.msra.mxu0 %v782
      %1602 = vmatpush.bf16.msra.mxu0 %v778
      %1603 = vmatpush.bf16.msra.mxu0 %v774
      %1604 = vmatpush.bf16.msra.mxu0 %v770
      %1605 = vmatpush.bf16.msra.mxu0 %v766
      %1606 = vmatpush.bf16.msra.mxu0 %v762
      %1607 = vmatmul.bf16.gmra.mxu0 %v1598
      %v1608 = vpop.f32.mrf.mxu0
      %v1609 = vadd.f32 0.0, %v1608
      %v1610 = vpop.f32.mrf.mxu0
      %1611 = vdwg.mxu0
      %1612 = vmatpush.bf16.msra.mxu0 %v791
      %1613 = vmatpush.bf16.msra.mxu0 %v787
      %1614 = vmatpush.bf16.msra.mxu0 %v783
      %1615 = vmatpush.bf16.msra.mxu0 %v779
      %1616 = vmatpush.bf16.msra.mxu0 %v775
      %1617 = vmatpush.bf16.msra.mxu0 %v771
      %1618 = vmatpush.bf16.msra.mxu0 %v767
      %1619 = vmatpush.bf16.msra.mxu0 %v763
      %1620 = vmatmul.bf16.gmra.mxu0 %v1598
      %v1621 = vpop.f32.mrf.mxu0
      %v1622 = vadd.f32 0.0, %v1621
      %v1623 = vpop.f32.mrf.mxu0
      %1624 = vdwg.mxu0
      %1625 = vmatpush.bf16.msra.mxu0 %v792
      %1626 = vmatpush.bf16.msra.mxu0 %v788
      %1627 = vmatpush.bf16.msra.mxu0 %v784
      %1628 = vmatpush.bf16.msra.mxu0 %v780
      %1629 = vmatpush.bf16.msra.mxu0 %v776
      %1630 = vmatpush.bf16.msra.mxu0 %v772
      %1631 = vmatpush.bf16.msra.mxu0 %v768
      %1632 = vmatpush.bf16.msra.mxu0 %v764
      %1633 = vmatmul.bf16.gmra.mxu0 %v1598
      %v1634 = vpop.f32.mrf.mxu0
      %v1635 = vadd.f32 0.0, %v1634
      %v1636 = vpop.f32.mrf.mxu0
      %1637 = vdwg.mxu0
      %1638 = vmatpush.bf16.msra.mxu0 %v793
      %1639 = vmatpush.bf16.msra.mxu0 %v789
      %1640 = vmatpush.bf16.msra.mxu0 %v785
      %1641 = vmatpush.bf16.msra.mxu0 %v781
      %1642 = vmatpush.bf16.msra.mxu0 %v777
      %1643 = vmatpush.bf16.msra.mxu0 %v773
      %1644 = vmatpush.bf16.msra.mxu0 %v769
      %1645 = vmatpush.bf16.msra.mxu0 %v765
      %1646 = vmatmul.bf16.gmra.mxu0 %v1598
      %v1647 = vpop.f32.mrf.mxu0
      %v1648 = vadd.f32 0.0, %v1647
      %v1649 = vpop.f32.mrf.mxu0
      %1650 = vdwg.mxu0
      %v1651 = vadd.f32 %v1594, %v1609
      %v1652 = vadd.f32 %v1595, %v1622
      %v1653 = vadd.f32 %v1596, %v1635
      %v1654 = vadd.f32 %v1597, %v1648
      %v1655 = vxor.u32 %v1651, 2147483648
      %v1656 = vmul.f32 %v1655, 1.442695
      %v1657 = vpow.pop %v1656
      %v1658 = vadd.f32 %v1657, 1.0
      %v1659 = vrcp.pop %v1658
      %v1660 = vmul.f32 %v1658, %v1659
      %v1661 = vsub.f32 1.0, %v1660
      %v1662 = vmul.f32 %v1659, %v1661
      %v1663 = vadd.f32 %v1659, %v1662
      %vm1664 = vweird.f32 %v1658
      %vm1665 = vweird.f32 %v1659
      %vm1666 = vmor %vm1664, %vm1665
      %v1667 = vsel %vm1666, %v1659, %v1663
      %v1668 = vand.u32 2147483647, %v1658
      %vm1669 = vcmp.eq.f32.partialorder %v1668, 8.507059e+37
      %v1670 = vand.u32 %v1658, 2147483648
      %v1671 = vor.u32 1.1754944e-38, %v1670
      %v1672 = vsel %vm1669, %v1671, %v1667
      %v1673 = vmul.f32 1.0, %v1672
      %v1674 = vxor.u32 %v1652, 2147483648
      %v1675 = vmul.f32 %v1674, 1.442695
      %v1676 = vpow.pop %v1675
      %v1677 = vadd.f32 %v1676, 1.0
      %v1678 = vrcp.pop %v1677
      %v1679 = vmul.f32 %v1677, %v1678
      %v1680 = vsub.f32 1.0, %v1679
      %v1681 = vmul.f32 %v1678, %v1680
      %v1682 = vadd.f32 %v1678, %v1681
      %vm1683 = vweird.f32 %v1677
      %vm1684 = vweird.f32 %v1678
      %vm1685 = vmor %vm1683, %vm1684
      %v1686 = vsel %vm1685, %v1678, %v1682
      %v1687 = vand.u32 2147483647, %v1677
      %vm1688 = vcmp.eq.f32.partialorder %v1687, 8.507059e+37
      %v1689 = vand.u32 %v1677, 2147483648
      %v1690 = vor.u32 1.1754944e-38, %v1689
      %v1691 = vsel %vm1688, %v1690, %v1686
      %v1692 = vmul.f32 1.0, %v1691
      %v1693 = vtanh.pop %v1653
      %v1694 = vxor.u32 %v1654, 2147483648
      %v1695 = vmul.f32 %v1694, 1.442695
      %v1696 = vpow.pop %v1695
      %v1697 = vadd.f32 %v1696, 1.0
      %v1698 = vrcp.pop %v1697
      %v1699 = vmul.f32 %v1697, %v1698
      %v1700 = vsub.f32 1.0, %v1699
      %v1701 = vmul.f32 %v1698, %v1700
      %v1702 = vadd.f32 %v1698, %v1701
      %vm1703 = vweird.f32 %v1697
      %vm1704 = vweird.f32 %v1698
      %vm1705 = vmor %vm1703, %vm1704
      %v1706 = vsel %vm1705, %v1698, %v1702
      %v1707 = vand.u32 2147483647, %v1697
      %vm1708 = vcmp.eq.f32.partialorder %v1707, 8.507059e+37
      %v1709 = vand.u32 %v1697, 2147483648
      %v1710 = vor.u32 1.1754944e-38, %v1709
      %v1711 = vsel %vm1708, %v1710, %v1706
      %v1712 = vmul.f32 1.0, %v1711
      %v1713 = vmul.f32 %v1692, %v1586
      %v1714 = vmul.f32 %v1673, %v1693
      %v1715 = vadd.f32 %v1713, %v1714
      %v1716 = vtanh.pop %v1715
      %v1717 = vmul.f32 %v1712, %v1716
      %s1718 = scalar_lea.vmem %s265, 48
      %1719 = vst [vmem:[%s1718] sm:$0xff] %v1717
      %s1720 = smul.u32 7, 4
      %s1721 = smul.addr %s1720, 8
      %s1722 = scalar_lea.vmem [#allocation4], %s1721
      %v1723 = vld [vmem:[%s1722] sm:$0xff]
      %v1724 = vld [vmem:[%s1722 + $0x8] sm:$0xff]
      %v1725 = vld [vmem:[%s1722 + $0x10] sm:$0xff]
      %v1726 = vld [vmem:[%s1722 + $0x18] sm:$0xff]
      %v1727 = vpack.c.bf16 %v1717, %v1717
      %1728 = vmatpush.bf16.msra.mxu0 %v790
      %1729 = vmatpush.bf16.msra.mxu0 %v786
      %1730 = vmatpush.bf16.msra.mxu0 %v782
      %1731 = vmatpush.bf16.msra.mxu0 %v778
      %1732 = vmatpush.bf16.msra.mxu0 %v774
      %1733 = vmatpush.bf16.msra.mxu0 %v770
      %1734 = vmatpush.bf16.msra.mxu0 %v766
      %1735 = vmatpush.bf16.msra.mxu0 %v762
      %1736 = vmatmul.bf16.gmra.mxu0 %v1727
      %v1737 = vpop.f32.mrf.mxu0
      %v1738 = vadd.f32 0.0, %v1737
      %v1739 = vpop.f32.mrf.mxu0
      %1740 = vdwg.mxu0
      %1741 = vmatpush.bf16.msra.mxu0 %v791
      %1742 = vmatpush.bf16.msra.mxu0 %v787
      %1743 = vmatpush.bf16.msra.mxu0 %v783
      %1744 = vmatpush.bf16.msra.mxu0 %v779
      %1745 = vmatpush.bf16.msra.mxu0 %v775
      %1746 = vmatpush.bf16.msra.mxu0 %v771
      %1747 = vmatpush.bf16.msra.mxu0 %v767
      %1748 = vmatpush.bf16.msra.mxu0 %v763
      %1749 = vmatmul.bf16.gmra.mxu0 %v1727
      %v1750 = vpop.f32.mrf.mxu0
      %v1751 = vadd.f32 0.0, %v1750
      %v1752 = vpop.f32.mrf.mxu0
      %1753 = vdwg.mxu0
      %1754 = vmatpush.bf16.msra.mxu0 %v792
      %1755 = vmatpush.bf16.msra.mxu0 %v788
      %1756 = vmatpush.bf16.msra.mxu0 %v784
      %1757 = vmatpush.bf16.msra.mxu0 %v780
      %1758 = vmatpush.bf16.msra.mxu0 %v776
      %1759 = vmatpush.bf16.msra.mxu0 %v772
      %1760 = vmatpush.bf16.msra.mxu0 %v768
      %1761 = vmatpush.bf16.msra.mxu0 %v764
      %1762 = vmatmul.bf16.gmra.mxu0 %v1727
      %v1763 = vpop.f32.mrf.mxu0
      %v1764 = vadd.f32 0.0, %v1763
      %v1765 = vpop.f32.mrf.mxu0
      %1766 = vdwg.mxu0
      %1767 = vmatpush.bf16.msra.mxu0 %v793
      %1768 = vmatpush.bf16.msra.mxu0 %v789
      %1769 = vmatpush.bf16.msra.mxu0 %v785
      %1770 = vmatpush.bf16.msra.mxu0 %v781
      %1771 = vmatpush.bf16.msra.mxu0 %v777
      %1772 = vmatpush.bf16.msra.mxu0 %v773
      %1773 = vmatpush.bf16.msra.mxu0 %v769
      %1774 = vmatpush.bf16.msra.mxu0 %v765
      %1775 = vmatmul.bf16.gmra.mxu0 %v1727
      %v1776 = vpop.f32.mrf.mxu0
      %v1777 = vadd.f32 0.0, %v1776
      %v1778 = vpop.f32.mrf.mxu0
      %1779 = vdwg.mxu0
      %v1780 = vadd.f32 %v1723, %v1738
      %v1781 = vadd.f32 %v1724, %v1751
      %v1782 = vadd.f32 %v1725, %v1764
      %v1783 = vadd.f32 %v1726, %v1777
      %v1784 = vxor.u32 %v1780, 2147483648
      %v1785 = vmul.f32 %v1784, 1.442695
      %v1786 = vpow.pop %v1785
      %v1787 = vadd.f32 %v1786, 1.0
      %v1788 = vrcp.pop %v1787
      %v1789 = vmul.f32 %v1787, %v1788
      %v1790 = vsub.f32 1.0, %v1789
      %v1791 = vmul.f32 %v1788, %v1790
      %v1792 = vadd.f32 %v1788, %v1791
      %vm1793 = vweird.f32 %v1787
      %vm1794 = vweird.f32 %v1788
      %vm1795 = vmor %vm1793, %vm1794
      %v1796 = vsel %vm1795, %v1788, %v1792
      %v1797 = vand.u32 2147483647, %v1787
      %vm1798 = vcmp.eq.f32.partialorder %v1797, 8.507059e+37
      %v1799 = vand.u32 %v1787, 2147483648
      %v1800 = vor.u32 1.1754944e-38, %v1799
      %v1801 = vsel %vm1798, %v1800, %v1796
      %v1802 = vmul.f32 1.0, %v1801
      %v1803 = vxor.u32 %v1781, 2147483648
      %v1804 = vmul.f32 %v1803, 1.442695
      %v1805 = vpow.pop %v1804
      %v1806 = vadd.f32 %v1805, 1.0
      %v1807 = vrcp.pop %v1806
      %v1808 = vmul.f32 %v1806, %v1807
      %v1809 = vsub.f32 1.0, %v1808
      %v1810 = vmul.f32 %v1807, %v1809
      %v1811 = vadd.f32 %v1807, %v1810
      %vm1812 = vweird.f32 %v1806
      %vm1813 = vweird.f32 %v1807
      %vm1814 = vmor %vm1812, %vm1813
      %v1815 = vsel %vm1814, %v1807, %v1811
      %v1816 = vand.u32 2147483647, %v1806
      %vm1817 = vcmp.eq.f32.partialorder %v1816, 8.507059e+37
      %v1818 = vand.u32 %v1806, 2147483648
      %v1819 = vor.u32 1.1754944e-38, %v1818
      %v1820 = vsel %vm1817, %v1819, %v1815
      %v1821 = vmul.f32 1.0, %v1820
      %v1822 = vtanh.pop %v1782
      %v1823 = vxor.u32 %v1783, 2147483648
      %v1824 = vmul.f32 %v1823, 1.442695
      %v1825 = vpow.pop %v1824
      %v1826 = vadd.f32 %v1825, 1.0
      %v1827 = vrcp.pop %v1826
      %v1828 = vmul.f32 %v1826, %v1827
      %v1829 = vsub.f32 1.0, %v1828
      %v1830 = vmul.f32 %v1827, %v1829
      %v1831 = vadd.f32 %v1827, %v1830
      %vm1832 = vweird.f32 %v1826
      %vm1833 = vweird.f32 %v1827
      %vm1834 = vmor %vm1832, %vm1833
      %v1835 = vsel %vm1834, %v1827, %v1831
      %v1836 = vand.u32 2147483647, %v1826
      %vm1837 = vcmp.eq.f32.partialorder %v1836, 8.507059e+37
      %v1838 = vand.u32 %v1826, 2147483648
      %v1839 = vor.u32 1.1754944e-38, %v1838
      %v1840 = vsel %vm1837, %v1839, %v1835
      %v1841 = vmul.f32 1.0, %v1840
      %v1842 = vmul.f32 %v1821, %v1715
      %v1843 = vmul.f32 %v1802, %v1822
      %v1844 = vadd.f32 %v1842, %v1843
      %v1845 = vtanh.pop %v1844
      %v1846 = vmul.f32 %v1841, %v1845
      %s1847 = scalar_lea.vmem %s265, 56
      %1848 = vst [vmem:[%s1847] sm:$0xff] %v1846
      %1849 = vst [vmem:[#allocation5] sm:$0xff] %v1846
      %1850 = vst [vmem:[#allocation6] sm:$0xff] %v1844
      // Predicated region
      $region71: #{traversal_lstm_forward.1} parent=27 // pred_check
        %p1851 = pneg %p276
      $region72: #{traversal_lstm_forward.1} parent=27 // pred_check_branch
        %1853 = sbr.rel (%p1851) target = $region74
      $region73: #{traversal_lstm_forward.1} parent=27 // pred_region
        %1854 = vst [vmem:[%s270] sm:$0xff] %v1846
        %1855 = vst [vmem:[%s274] sm:$0xff] %v1844
      $region74: #{traversal_lstm_forward.1} parent=27 // pred_fallthru
        _
      %s1856 = smul.u32 8, %s23
      %p1857 = scmp.lt.s32.totalorder %s22, 1
      %s1858 = scalar_select %p1857, %s22, 1
      %p1859 = scmp.lt.s32.totalorder %s1856, 7
      %s1860 = scalar_select %p1859, %s1856, 7
      %s1861 = smul.addr %s1858, 8
      %s1862 = sadd.s32 %s1860, %s1861
      %s1863 = smul.addr %s1862, 8
      %s1864 = scalar_lea.vmem %s4, %s1863
      %p1865 = scmp.lt.s32.totalorder %s22, 1
      %s1866 = scalar_select %p1865, %s22, 1
      %s1867 = smul.addr %s1866, 8
      %s1868 = scalar_lea.vmem %s5, %s1867
      %p1869 = scmp.lt.s32.totalorder %s22, 1
      %s1870 = scalar_select %p1869, %s22, 1
      %s1871 = smul.addr %s1870, 8
      %s1872 = scalar_lea.vmem %s6, %s1871
      // Predicated region
      $region75: #{traversal_lstm_forward.1} parent=27 // pred_check
        %p1873 = pneg %p104
      $region76: #{traversal_lstm_forward.1} parent=27 // pred_check_branch
        %1875 = sbr.rel (%p1873) target = $region78
      $region77: #{traversal_lstm_forward.1} parent=27 // pred_region
        %s1876 = smul.u32 8, %s23
      $region78: #{traversal_lstm_forward.1} parent=27 // pred_fallthru
        _
      // Predicated region
      $region79: #{traversal_lstm_forward.1} parent=27 // pred_check
        %p1877 = pneg %p130
      $region80: #{traversal_lstm_forward.1} parent=27 // pred_check_branch
        %1879 = sbr.rel (%p1877) target = $region82
      $region81: #{traversal_lstm_forward.1} parent=27 // pred_region
        _
      $region82: #{traversal_lstm_forward.1} parent=27 // pred_fallthru
        _
      // Predicated region
      $region83: #{traversal_lstm_forward.1} parent=27 // pred_check
        %p1880 = pneg %p156
      $region84: #{traversal_lstm_forward.1} parent=27 // pred_check_branch
        %1882 = sbr.rel (%p1880) target = $region86
      $region85: #{traversal_lstm_forward.1} parent=27 // pred_region
        _
      $region86: #{traversal_lstm_forward.1} parent=27 // pred_fallthru
        _
    $region28: #{traversal_lstm_forward.1} parent=5 // pred_fallthru
      _
    %p1883 = scmp.le.s32.totalorder 2, %s13
    // Predicated region
    $region87: #{traversal_lstm_forward.1} parent=5 // pred_check
      %p1884 = pneg %p1883
    $region88: #{traversal_lstm_forward.1} parent=5 // pred_check_branch
      %1886 = sbr.rel (%p1884) target = $region90
    $region89: #{traversal_lstm_forward.1} parent=5 // pred_region
      %s1887 = ssub.s32 %s13, 2
      // Predicated region
      $region91: #{traversal_lstm_forward.1} parent=89 // pred_check
        %p1888 = pneg %p110
      $region92: #{traversal_lstm_forward.1} parent=89 // pred_check_branch
        %1890 = sbr.rel (%p1888) target = $region94
      $region93: #{traversal_lstm_forward.1} parent=89 // pred_region
        %s1891 = smul.u32 8, %s25
        %p1892 = scmp.lt.s32.totalorder %s24, 1
        %s1893 = scalar_select %p1892, %s24, 1
        %p1894 = scmp.lt.s32.totalorder %s1891, 7
        %s1895 = scalar_select %p1894, %s1891, 7
        %s1896 = smul.addr %s1893, 8
        %s1897 = sadd.s32 %s1895, %s1896
        %s1898 = smul.addr %s1897, 8
        %s1899 = scalar_lea.vmem %s4, %s1898
      $region94: #{traversal_lstm_forward.1} parent=89 // pred_fallthru
        _
      // Predicated region
      $region95: #{traversal_lstm_forward.1} parent=89 // pred_check
        %p1900 = pneg %p136
      $region96: #{traversal_lstm_forward.1} parent=89 // pred_check_branch
        %1902 = sbr.rel (%p1900) target = $region98
      $region97: #{traversal_lstm_forward.1} parent=89 // pred_region
        %p1903 = scmp.lt.s32.totalorder %s24, 1
        %s1904 = scalar_select %p1903, %s24, 1
        %s1905 = smul.addr %s1904, 8
        %s1906 = scalar_lea.vmem %s5, %s1905
      $region98: #{traversal_lstm_forward.1} parent=89 // pred_fallthru
        _
      // Predicated region
      $region99: #{traversal_lstm_forward.1} parent=89 // pred_check
        %p1907 = pneg %p162
      $region100: #{traversal_lstm_forward.1} parent=89 // pred_check_branch
        %1909 = sbr.rel (%p1907) target = $region102
      $region101: #{traversal_lstm_forward.1} parent=89 // pred_region
        %p1910 = scmp.lt.s32.totalorder %s24, 1
        %s1911 = scalar_select %p1910, %s24, 1
        %s1912 = smul.addr %s1911, 8
        %s1913 = scalar_lea.vmem %s6, %s1912
      $region102: #{traversal_lstm_forward.1} parent=89 // pred_fallthru
        _
    $region90: #{traversal_lstm_forward.1} parent=5 // pred_fallthru
      _
  $region6: #{traversal_lstm_forward.1} parent=0 // loop_footer
    %s17 = sadd.s32 1, %s13
  $region7: #{traversal_lstm_forward.1} parent=0 // loop_footer_branch
    %12 = sbr.rel target = $region3
  $region8: #{traversal_lstm_forward.1} parent=0 // loop_exit
    _
  %1914 = vsyncmov [#allocation7]
  %s1915 = vpop.sfrf %1914
  %p1916 = scmp.eq.s32.totalorder %s1915, 0
  %p1917 = pneg %p1916
  %1919 = shalt.err (%p1917)
  %s1920 = scalar_lea.sflag [#allocation7], 1
  %1921 = vsyncmov %s1920
  %s1922 = vpop.sfrf %1921
  %p1923 = scmp.eq.s32.totalorder %s1922, 0
  %p1924 = pneg %p1923
  %1926 = shalt.err (%p1924)

</llo_original>
